<compile_context>
chip_gen: v5e
topology: v5e:2x2
jax: 0.10.0
libtpu: 0.0.40
codegen_flags: <defaults>
</compile_context>

<pallas_src>
import math
from functools import partial

import jax
import jax.numpy as jnp
from jax.experimental import pallas as pl
from jax.experimental.pallas import tpu as pltpu

TIMESTAMP_COLUMN = 0
POLARITY_COLUMN = 3


# ----------------------------------------------------------------------------
# Fused TemporalEmbedding kernel
# ----------------------------------------------------------------------------
def _temporal_embedding_kernel(x_ref, w_ref, o_ref):
    # x_ref: [tm, D]  rows = flattened points, D = xytp columns (>= 4)
    # w_ref: [4, C]   rows = (w_pos, w_neg, b_pos, b_neg)
    # o_ref: [tm, C]
    x = x_ref[...]
    t = x[:, TIMESTAMP_COLUMN:TIMESTAMP_COLUMN + 1]     # [tm, 1]
    p = x[:, POLARITY_COLUMN:POLARITY_COLUMN + 1]       # [tm, 1]
    w_pos = w_ref[0:1, :]                               # [1, C]
    w_neg = w_ref[1:2, :]
    b_pos = w_ref[2:3, :]
    b_neg = w_ref[3:4, :]
    # in_channel == 1 linear == per-channel affine; pure VPU broadcast-FMA (no MXU).
    pos = t * w_pos + b_pos                             # [tm, C]
    neg = t * w_neg + b_neg                             # [tm, C]
    o_ref[...] = pos * p + neg * (1.0 - p)


def _round_up(x, m):
    return ((x + m - 1) // m) * m


def temporal_embedding(xytp, params, *, row_tile=1024):
    """xytp: [..., D>=4] float; params: dict with pos_w/pos_b/neg_w/neg_b each [C]."""
    lead = xytp.shape[:-1]
    D = xytp.shape[-1]
    M = int(math.prod(lead)) if lead else 1
    C = params["pos_w"].shape[-1]

    x = xytp.reshape(M, D).astype(jnp.float32)
    # Pack the four parameter vectors into one resident [4, C] block (single tiny DMA).
    w = jnp.stack(
        [params["pos_w"], params["neg_w"], params["pos_b"], params["neg_b"]], axis=0
    ).astype(jnp.float32)

    # Large row tiles (sublane-aligned); pad rows so the grid divides evenly.
    tm = min(row_tile, _round_up(M, 8))
    Mp = _round_up(M, tm)
    if Mp != M:
        x = jnp.concatenate([x, jnp.zeros((Mp - M, D), jnp.float32)], axis=0)

    out = pl.pallas_call(
        _temporal_embedding_kernel,
        out_shape=jax.ShapeDtypeStruct((Mp, C), jnp.float32),
        grid=(Mp // tm,),
        in_specs=[
            pl.BlockSpec((tm, D), lambda i: (i, 0)),   # point tile
            pl.BlockSpec((4, C), lambda i: (0, 0)),    # packed params (resident)
        ],
        out_specs=pl.BlockSpec((tm, C), lambda i: (i, 0)),
        compiler_params=pltpu.CompilerParams(dimension_semantics=("parallel",)),
    )(x, w)

    return out[:M].reshape(*lead, C)


# ----------------------------------------------------------------------------
# Pure-JAX reference (mirrors the PyTorch forward exactly)
# ----------------------------------------------------------------------------
def temporal_embedding_ref(xytp, params):
    t = xytp[..., TIMESTAMP_COLUMN:TIMESTAMP_COLUMN + 1]
    p = xytp[..., POLARITY_COLUMN:POLARITY_COLUMN + 1]
    pos = t * params["pos_w"] + params["pos_b"]
    neg = t * params["neg_w"] + params["neg_b"]
    return pos * p + neg * (1.0 - p)


# ----------------------------------------------------------------------------
# Deterministic inputs / parameters (nn.Linear(1, C) init: U(-1/sqrt(1), 1/sqrt(1)))
# ----------------------------------------------------------------------------
def make_case(key, B, N, C):
    k1, k2, k3, k4, k5, k6 = jax.random.split(key, 6)
    xyt = jax.random.normal(k1, (B, N, 3), jnp.float32)
    pol = jax.random.bernoulli(k2, 0.5, (B, N, 1)).astype(jnp.float32)
    xytp = jnp.concatenate([xyt, pol], axis=-1)          # columns: [t, x, y, polarity]
    params = {
        "pos_w": jax.random.uniform(k3, (C,), jnp.float32, -1.0, 1.0),
        "pos_b": jax.random.uniform(k4, (C,), jnp.float32, -1.0, 1.0),
        "neg_w": jax.random.uniform(k5, (C,), jnp.float32, -1.0, 1.0),
        "neg_b": jax.random.uniform(k6, (C,), jnp.float32, -1.0, 1.0),
    }
    return xytp, params


if __name__ == "__main__":
    key = jax.random.PRNGKey(0)
    k_main, k_small = jax.random.split(key)

    fwd = jax.jit(temporal_embedding)

    # Main config: out_channel = 128 -> fully lane-dense output stores, 2-step parallel grid.
    xytp, params = make_case(k_main, 2, 1024, 128)
    out = jax.block_until_ready(fwd(xytp, params))
    assert out.shape == (2, 1024, 128)
    assert bool(jnp.all(jnp.isfinite(out)))
    assert bool(jnp.allclose(out, temporal_embedding_ref(xytp, params), rtol=1e-5, atol=1e-5))

    # Small / ragged config: out_channel = 32, M = 200 (exercises row padding + masked stores).
    xytp2, params2 = make_case(k_small, 2, 100, 32)
    out2 = jax.block_until_ready(fwd(xytp2, params2))
    assert out2.shape == (2, 100, 32)
    assert bool(jnp.all(jnp.isfinite(out2)))
    assert bool(jnp.allclose(out2, temporal_embedding_ref(xytp2, params2), rtol=1e-5, atol=1e-5))

    print("KERNEL_OK")
</pallas_src>

<mosaic_0001>
module attributes {stable_mosaic.version = 11 : i64} {
  func.func @_temporal_embedding_kernel(%arg0: i32, %arg1: memref<1024x4xf32, #tpu.memory_space<vmem>>, %arg2: memref<4x128xf32, #tpu.memory_space<vmem>>, %arg3: memref<1024x128xf32, #tpu.memory_space<vmem>>) attributes {dimension_semantics = [#tpu.dimension_semantics<parallel>], iteration_bounds = array<i64: 2>, scalar_prefetch = 0 : i64, scratch_operands = 0 : i64, tpu.core_type = #tpu.core_type<tc>, window_params = [{transform_indices = @transform_0, window_bounds = array<i64: 1024, 4>}, {pipeline_mode = #tpu.pipeline_mode<synchronous>, transform_indices = @transform_1, window_bounds = array<i64: 4, 128>}, {transform_indices = @transform_2, window_bounds = array<i64: 1024, 128>}]} {
    %c0 = arith.constant 0 : index
    %c0_0 = arith.constant 0 : index
    %0 = vector.load %arg1[%c0, %c0_0] : memref<1024x4xf32, #tpu.memory_space<vmem>>, vector<1024x4xf32>
    %1 = vector.extract_strided_slice %0 {offsets = [0, 0], sizes = [1024, 1], strides = [1, 1]} : vector<1024x4xf32> to vector<1024x1xf32>
    %2 = vector.extract_strided_slice %0 {offsets = [0, 3], sizes = [1024, 1], strides = [1, 1]} : vector<1024x4xf32> to vector<1024x1xf32>
    %c0_1 = arith.constant 0 : index
    %c0_2 = arith.constant 0 : index
    %3 = vector.load %arg2[%c0_1, %c0_2] : memref<4x128xf32, #tpu.memory_space<vmem>>, vector<1x128xf32>
    %c1 = arith.constant 1 : index
    %c0_3 = arith.constant 0 : index
    %4 = vector.load %arg2[%c1, %c0_3] : memref<4x128xf32, #tpu.memory_space<vmem>>, vector<1x128xf32>
    %c2 = arith.constant 2 : index
    %c0_4 = arith.constant 0 : index
    %5 = vector.load %arg2[%c2, %c0_4] : memref<4x128xf32, #tpu.memory_space<vmem>>, vector<1x128xf32>
    %c3 = arith.constant 3 : index
    %c0_5 = arith.constant 0 : index
    %6 = vector.load %arg2[%c3, %c0_5] : memref<4x128xf32, #tpu.memory_space<vmem>>, vector<1x128xf32>
    %7 = vector.broadcast %1 : vector<1024x1xf32> to vector<1024x128xf32>
    %8 = vector.broadcast %3 : vector<1x128xf32> to vector<1024x128xf32>
    %9 = arith.mulf %7, %8 : vector<1024x128xf32>
    %10 = vector.broadcast %5 : vector<1x128xf32> to vector<1024x128xf32>
    %11 = arith.addf %9, %10 : vector<1024x128xf32>
    %12 = vector.broadcast %1 : vector<1024x1xf32> to vector<1024x128xf32>
    %13 = vector.broadcast %4 : vector<1x128xf32> to vector<1024x128xf32>
    %14 = arith.mulf %12, %13 : vector<1024x128xf32>
    %15 = vector.broadcast %6 : vector<1x128xf32> to vector<1024x128xf32>
    %16 = arith.addf %14, %15 : vector<1024x128xf32>
    %17 = vector.broadcast %2 : vector<1024x1xf32> to vector<1024x128xf32>
    %18 = arith.mulf %11, %17 : vector<1024x128xf32>
    %cst = arith.constant 1.000000e+00 : f32
    %19 = vector.broadcast %cst : f32 to vector<1024x1xf32>
    %20 = arith.subf %19, %2 : vector<1024x1xf32>
    %21 = vector.broadcast %20 : vector<1024x1xf32> to vector<1024x128xf32>
    %22 = arith.mulf %16, %21 : vector<1024x128xf32>
    %23 = arith.addf %18, %22 : vector<1024x128xf32>
    %c0_6 = arith.constant 0 : index
    %c0_7 = arith.constant 0 : index
    %24 = vector.load %arg3[%c0_6, %c0_7] : memref<1024x128xf32, #tpu.memory_space<vmem>>, vector<1024x128xf32>
    tpu.vector_store %arg3[%c0_6, %c0_7], %23 {strides = array<i32>} : memref<1024x128xf32, #tpu.memory_space<vmem>>, vector<1024x128xf32>,
    return
  }
  func.func @transform_0(%arg0: i32) -> (i32, i32) {
    %c0_i32 = arith.constant 0 : i32
    %c0_i32_0 = arith.constant 0 : i32
    return %arg0, %c0_i32 : i32, i32
  }
  func.func @transform_1(%arg0: i32) -> (i32, i32) {
    %c0_i32 = arith.constant 0 : i32
    %c0_i32_0 = arith.constant 0 : i32
    %c0_i32_1 = arith.constant 0 : i32
    return %c0_i32, %c0_i32_0 : i32, i32
  }
  func.func @transform_2(%arg0: i32) -> (i32, i32) {
    %c0_i32 = arith.constant 0 : i32
    %c0_i32_0 = arith.constant 0 : i32
    return %arg0, %c0_i32 : i32, i32
  }
}

</mosaic_0001>

<llo_original>
// kernel: temporal_embedding.1
$region0: #{temporal_embedding.1}
  #allocation0 [shape = 'u32[]', space=smem, size = 0x4, offset = 0x4, fixed_abs, tag = 'smem constant byte address 0x4 - core index']
  #allocation1 [shape = 'u32[72,128]{1,0:T(1,128)}', space=vmem, size = 0x9000, scoped, tag = 'internal scratch']
  %s0 = inlined_call_operand.vmem [shape: f32[2048,4], index: 0, kind: input, shape index: {}]
  %s1 = inlined_call_operand.vmem [shape: f32[4,128], index: 1, kind: input, shape index: {}]
  %s2 = inlined_call_operand.hbm [shape: f32[2048,128], index: 2, kind: output, shape index: {}]
  %s3 = sld [smem:[#allocation0]]
  $region41: #{temporal_embedding.1} parent=0
    _
  %s5 = ssub.s32 1, %s3
  %s6 = scalar_select 0, %s5, %s3
  $region1: #{temporal_embedding.1} parent=0
    #allocation2 [shape = 'u8[1048576]{0}', space=vmem, size = 0x100000, scoped, tag = 'output window, operand 0']
    #allocation3 [shape = 's32[2]{0}', space=sflag, size = 0x8, scoped, tag = 'scoped memory for temporal_embedding.1']
    %7 = vsyncpa [#allocation3], 0
    %s8 = scalar_lea.sflag [#allocation3], 1
    %9 = vsyncpa %s8, 0
    loop: start=0, step=1, limit=4
    $region2: #{temporal_embedding.1} parent=1 // loop_pre_header
      _
    $region3: #{temporal_embedding.1} parent=1 // loop_header
      %s11 = sphi 0, %s15
      %p12 = scmp.ge.s32.totalorder %s11, 4
      %s21 = sphi 0, %s23
      %s24 = sphi 0, %s21
      %s25 = sphi 0, %s24
      %s41 = sphi 0, %s25
      %s45 = sphi 0, %s45
      %s47 = sphi 0, %s45
      %s48 = sphi 0, %s47
      %s62 = sphi 0, %s48
      %s68 = sphi 0, %s70
      %s71 = sphi 0, %s68
      %s72 = sphi 0, %s71
      %s88 = sphi 0, %s72
    $region4: #{temporal_embedding.1} parent=1 // loop_header_branch
      %14 = sbr.rel (%p12) target = $region8
    $region5: #{temporal_embedding.1} parent=1 // loop_body
      %s16 = ssub.s32 %s11, 1
      %s17 = ssub.s32 %s11, 2
      %s18 = sadd.s32 %s11, 1
      %s19 = ssub.s32 %s11, %s18
      %p20 = scmp.eq.s32.totalorder %s19, 0
      %s22 = sadd.s32 %s21, 1
      %s23 = scalar_select %p20, %s21, %s22
      %p26 = pneg %p20
      %p27 = scmp.eq.s32.totalorder %s11, 1
      %p28 = por %p26, %p27
      %p29 = scmp.ne.s32.totalorder %s21, %s24
      %p30 = scmp.eq.s32.totalorder %s11, 0
      %p31 = por %p29, %p30
      %p32 = scmp.ne.s32.totalorder %s21, %s24
      %p33 = scmp.eq.s32.totalorder %s16, 1
      %p34 = por %p32, %p33
      %p35 = scmp.ne.s32.totalorder %s24, %s25
      %p36 = scmp.eq.s32.totalorder %s16, 0
      %p37 = por %p35, %p36
      %p38 = scmp.ne.s32.totalorder %s24, %s25
      %p39 = scmp.eq.s32.totalorder %s17, 1
      %p40 = por %p38, %p39
      %p42 = scmp.ne.s32.totalorder %s25, %s41
      %p43 = scmp.eq.s32.totalorder %s17, 0
      %p44 = por %p42, %p43
      %s46 = sadd.s32 %s45, 1
      %p49 = scmp.eq.s32.totalorder %s11, 1
      %p50 = scmp.ne.s32.totalorder %s45, %s47
      %p51 = scmp.eq.s32.totalorder %s11, 0
      %p52 = por %p50, %p51
      %p53 = scmp.ne.s32.totalorder %s45, %s47
      %p54 = scmp.eq.s32.totalorder %s16, 1
      %p55 = por %p53, %p54
      %p56 = scmp.ne.s32.totalorder %s47, %s48
      %p57 = scmp.eq.s32.totalorder %s16, 0
      %p58 = por %p56, %p57
      %p59 = scmp.ne.s32.totalorder %s47, %s48
      %p60 = scmp.eq.s32.totalorder %s17, 1
      %p61 = por %p59, %p60
      %p63 = scmp.ne.s32.totalorder %s48, %s62
      %p64 = scmp.eq.s32.totalorder %s17, 0
      %p65 = por %p63, %p64
      %s66 = ssub.s32 %s11, %s18
      %p67 = scmp.eq.s32.totalorder %s66, 0
      %s69 = sadd.s32 %s68, 1
      %s70 = scalar_select %p67, %s68, %s69
      %p73 = pneg %p67
      %p74 = scmp.eq.s32.totalorder %s11, 1
      %p75 = por %p73, %p74
      %p76 = scmp.ne.s32.totalorder %s68, %s71
      %p77 = scmp.eq.s32.totalorder %s11, 0
      %p78 = por %p76, %p77
      %p79 = scmp.ne.s32.totalorder %s68, %s71
      %p80 = scmp.eq.s32.totalorder %s16, 1
      %p81 = por %p79, %p80
      %p82 = scmp.ne.s32.totalorder %s71, %s72
      %p83 = scmp.eq.s32.totalorder %s16, 0
      %p84 = por %p82, %p83
      %p85 = scmp.ne.s32.totalorder %s71, %s72
      %p86 = scmp.eq.s32.totalorder %s17, 1
      %p87 = por %p85, %p86
      %p89 = scmp.ne.s32.totalorder %s72, %s88
      %p90 = scmp.eq.s32.totalorder %s17, 0
      %p91 = por %p89, %p90
      %p92 = scmp.le.s32.totalorder 1, %s11
      %p93 = scmp.lt.s32.totalorder %s11, 3
      %p94 = pnand %p92, %p93
      %p95 = pneg %p94
      // Predicated region
      $region9: #{temporal_embedding.1} parent=5 // pred_check
        _
      $region10: #{temporal_embedding.1} parent=5 // pred_check_branch
        %97 = sbr.rel (%p94) target = $region12
      $region11: #{temporal_embedding.1} parent=5 // pred_region
        %s98 = ssub.s32 %s11, 1
        // Predicated region
        $region13: #{temporal_embedding.1} parent=11 // pred_check
          %p99 = pneg %p58
        $region14: #{temporal_embedding.1} parent=11 // pred_check_branch
          %101 = sbr.rel (%p99) target = $region16
        $region15: #{temporal_embedding.1} parent=11 // pred_region
          _
        $region16: #{temporal_embedding.1} parent=11 // pred_fallthru
          _
      $region12: #{temporal_embedding.1} parent=5 // pred_fallthru
        _
      %p102 = scmp.lt.s32.totalorder %s11, 2
      // Predicated region
      $region17: #{temporal_embedding.1} parent=5 // pred_check
        %p103 = pneg %p102
      $region18: #{temporal_embedding.1} parent=5 // pred_check_branch
        %105 = sbr.rel (%p103) target = $region20
      $region19: #{temporal_embedding.1} parent=5 // pred_region
        // Predicated region
        $region21: #{temporal_embedding.1} parent=19 // pred_check
          %p106 = pneg %p31
        $region22: #{temporal_embedding.1} parent=19 // pred_check_branch
          %108 = sbr.rel (%p106) target = $region24
        $region23: #{temporal_embedding.1} parent=19 // pred_region
          %s109 = smul.u32 128, %s11
          %p110 = scmp.lt.s32.totalorder %s109, 255
          %s111 = scalar_select %p110, %s109, 255
          %s112 = smul.addr %s111, 8
          %s113 = scalar_lea.vmem %s0, %s112
          %s114 = smul.u32 128, %s11
        $region24: #{temporal_embedding.1} parent=19 // pred_fallthru
          _
      $region20: #{temporal_embedding.1} parent=5 // pred_fallthru
        _
      %p115 = scmp.le.s32.totalorder 1, %s11
      %p116 = scmp.lt.s32.totalorder %s11, 3
      %p117 = pnand %p115, %p116
      %p118 = pneg %p117
      // Predicated region
      $region25: #{temporal_embedding.1} parent=5 // pred_check
        _
      $region26: #{temporal_embedding.1} parent=5 // pred_check_branch
        %120 = sbr.rel (%p117) target = $region28
      $region27: #{temporal_embedding.1} parent=5 // pred_region
        %s121 = ssub.s32 %s11, 1
        %s122 = smul.u32 128, %s16
        %p123 = scmp.lt.s32.totalorder %s122, 255
        %s124 = scalar_select %p123, %s122, 255
        %s125 = smul.addr %s124, 8
        %s126 = scalar_lea.vmem %s0, %s125
        %p127 = pneg %p37
        %p128 = pneg %p34
        %p129 = pneg %p58
        %p130 = pneg %p55
        %p131 = pneg %p84
        %p132 = pneg %p81
        %s133 = sand.u32 %s71, 1
        %s134 = scalar_lea.sflag [#allocation3], %s133
        %s135 = sand.u32 %s71, 1
        %s136 = smul.addr %s135, 1024
        %s137 = scalar_lea.vmem [#allocation2], %s136
        %s138 = smul.u32 128, %s16
        %p139 = scmp.lt.s32.totalorder %s138, 255
        %s140 = scalar_select %p139, %s138, 255
        %s141 = smul.addr %s140, 8
        %s142 = scalar_lea.vmem %s0, %s141
        %s143 = smul.u32 128, %s16
        %s144 = smul.u32 128, %s16
        %v145 = vld [vmem:[%s142] sm:$0xff]
        %v146 = vld [vmem:[%s142 + $0x8] sm:$0xff]
        %v147 = vld [vmem:[%s142 + $0x10] sm:$0xff]
        %v148 = vld [vmem:[%s142 + $0x18] sm:$0xff]
        %v149 = vld [vmem:[%s142 + $0x20] sm:$0xff]
        %v150 = vld [vmem:[%s142 + $0x28] sm:$0xff]
        %v151 = vld [vmem:[%s142 + $0x30] sm:$0xff]
        %v152 = vld [vmem:[%s142 + $0x38] sm:$0xff]
        %v153 = vld [vmem:[%s142 + $0x40] sm:$0xff]
        %v154 = vld [vmem:[%s142 + $0x48] sm:$0xff]
        %v155 = vld [vmem:[%s142 + $0x50] sm:$0xff]
        %v156 = vld [vmem:[%s142 + $0x58] sm:$0xff]
        %v157 = vld [vmem:[%s142 + $0x60] sm:$0xff]
        %v158 = vld [vmem:[%s142 + $0x68] sm:$0xff]
        %v159 = vld [vmem:[%s142 + $0x70] sm:$0xff]
        %v160 = vld [vmem:[%s142 + $0x78] sm:$0xff]
        %v161 = vld [vmem:[%s142 + $0x80] sm:$0xff]
        %v162 = vld [vmem:[%s142 + $0x88] sm:$0xff]
        %v163 = vld [vmem:[%s142 + $0x90] sm:$0xff]
        %v164 = vld [vmem:[%s142 + $0x98] sm:$0xff]
        %v165 = vld [vmem:[%s142 + $0xa0] sm:$0xff]
        %v166 = vld [vmem:[%s142 + $0xa8] sm:$0xff]
        %v167 = vld [vmem:[%s142 + $0xb0] sm:$0xff]
        %v168 = vld [vmem:[%s142 + $0xb8] sm:$0xff]
        %v169 = vld [vmem:[%s142 + $0xc0] sm:$0xff]
        %v170 = vld [vmem:[%s142 + $0xc8] sm:$0xff]
        %v171 = vld [vmem:[%s142 + $0xd0] sm:$0xff]
        %v172 = vld [vmem:[%s142 + $0xd8] sm:$0xff]
        %v173 = vld [vmem:[%s142 + $0xe0] sm:$0xff]
        %v174 = vld [vmem:[%s142 + $0xe8] sm:$0xff]
        %v175 = vld [vmem:[%s142 + $0xf0] sm:$0xff]
        %v176 = vld [vmem:[%s142 + $0xf8] sm:$0xff]
        %v177 = vld [vmem:[%s142 + $0x100] sm:$0xff]
        %v178 = vld [vmem:[%s142 + $0x108] sm:$0xff]
        %v179 = vld [vmem:[%s142 + $0x110] sm:$0xff]
        %v180 = vld [vmem:[%s142 + $0x118] sm:$0xff]
        %v181 = vld [vmem:[%s142 + $0x120] sm:$0xff]
        %v182 = vld [vmem:[%s142 + $0x128] sm:$0xff]
        %v183 = vld [vmem:[%s142 + $0x130] sm:$0xff]
        %v184 = vld [vmem:[%s142 + $0x138] sm:$0xff]
        %v185 = vld [vmem:[%s142 + $0x140] sm:$0xff]
        %v186 = vld [vmem:[%s142 + $0x148] sm:$0xff]
        %v187 = vld [vmem:[%s142 + $0x150] sm:$0xff]
        %v188 = vld [vmem:[%s142 + $0x158] sm:$0xff]
        %v189 = vld [vmem:[%s142 + $0x160] sm:$0xff]
        %v190 = vld [vmem:[%s142 + $0x168] sm:$0xff]
        %v191 = vld [vmem:[%s142 + $0x170] sm:$0xff]
        %v192 = vld [vmem:[%s142 + $0x178] sm:$0xff]
        %v193 = vld [vmem:[%s142 + $0x180] sm:$0xff]
        %v194 = vld [vmem:[%s142 + $0x188] sm:$0xff]
        %v195 = vld [vmem:[%s142 + $0x190] sm:$0xff]
        %v196 = vld [vmem:[%s142 + $0x198] sm:$0xff]
        %v197 = vld [vmem:[%s142 + $0x1a0] sm:$0xff]
        %v198 = vld [vmem:[%s142 + $0x1a8] sm:$0xff]
        %v199 = vld [vmem:[%s142 + $0x1b0] sm:$0xff]
        %v200 = vld [vmem:[%s142 + $0x1b8] sm:$0xff]
        %v201 = vld [vmem:[%s142 + $0x1c0] sm:$0xff]
        %v202 = vld [vmem:[%s142 + $0x1c8] sm:$0xff]
        %v203 = vld [vmem:[%s142 + $0x1d0] sm:$0xff]
        %v204 = vld [vmem:[%s142 + $0x1d8] sm:$0xff]
        %v205 = vld [vmem:[%s142 + $0x1e0] sm:$0xff]
        %v206 = vld [vmem:[%s142 + $0x1e8] sm:$0xff]
        %v207 = vld [vmem:[%s142 + $0x1f0] sm:$0xff]
        %v208 = vld [vmem:[%s142 + $0x1f8] sm:$0xff]
        %v209 = vld [vmem:[%s142 + $0x200] sm:$0xff]
        %v210 = vld [vmem:[%s142 + $0x208] sm:$0xff]
        %v211 = vld [vmem:[%s142 + $0x210] sm:$0xff]
        %v212 = vld [vmem:[%s142 + $0x218] sm:$0xff]
        %v213 = vld [vmem:[%s142 + $0x220] sm:$0xff]
        %v214 = vld [vmem:[%s142 + $0x228] sm:$0xff]
        %v215 = vld [vmem:[%s142 + $0x230] sm:$0xff]
        %v216 = vld [vmem:[%s142 + $0x238] sm:$0xff]
        %v217 = vld [vmem:[%s142 + $0x240] sm:$0xff]
        %v218 = vld [vmem:[%s142 + $0x248] sm:$0xff]
        %v219 = vld [vmem:[%s142 + $0x250] sm:$0xff]
        %v220 = vld [vmem:[%s142 + $0x258] sm:$0xff]
        %v221 = vld [vmem:[%s142 + $0x260] sm:$0xff]
        %v222 = vld [vmem:[%s142 + $0x268] sm:$0xff]
        %v223 = vld [vmem:[%s142 + $0x270] sm:$0xff]
        %v224 = vld [vmem:[%s142 + $0x278] sm:$0xff]
        %v225 = vld [vmem:[%s142 + $0x280] sm:$0xff]
        %v226 = vld [vmem:[%s142 + $0x288] sm:$0xff]
        %v227 = vld [vmem:[%s142 + $0x290] sm:$0xff]
        %v228 = vld [vmem:[%s142 + $0x298] sm:$0xff]
        %v229 = vld [vmem:[%s142 + $0x2a0] sm:$0xff]
        %v230 = vld [vmem:[%s142 + $0x2a8] sm:$0xff]
        %v231 = vld [vmem:[%s142 + $0x2b0] sm:$0xff]
        %v232 = vld [vmem:[%s142 + $0x2b8] sm:$0xff]
        %v233 = vld [vmem:[%s142 + $0x2c0] sm:$0xff]
        %v234 = vld [vmem:[%s142 + $0x2c8] sm:$0xff]
        %v235 = vld [vmem:[%s142 + $0x2d0] sm:$0xff]
        %v236 = vld [vmem:[%s142 + $0x2d8] sm:$0xff]
        %v237 = vld [vmem:[%s142 + $0x2e0] sm:$0xff]
        %v238 = vld [vmem:[%s142 + $0x2e8] sm:$0xff]
        %v239 = vld [vmem:[%s142 + $0x2f0] sm:$0xff]
        %v240 = vld [vmem:[%s142 + $0x2f8] sm:$0xff]
        %v241 = vld [vmem:[%s142 + $0x300] sm:$0xff]
        %v242 = vld [vmem:[%s142 + $0x308] sm:$0xff]
        %v243 = vld [vmem:[%s142 + $0x310] sm:$0xff]
        %v244 = vld [vmem:[%s142 + $0x318] sm:$0xff]
        %v245 = vld [vmem:[%s142 + $0x320] sm:$0xff]
        %v246 = vld [vmem:[%s142 + $0x328] sm:$0xff]
        %v247 = vld [vmem:[%s142 + $0x330] sm:$0xff]
        %v248 = vld [vmem:[%s142 + $0x338] sm:$0xff]
        %v249 = vld [vmem:[%s142 + $0x340] sm:$0xff]
        %v250 = vld [vmem:[%s142 + $0x348] sm:$0xff]
        %v251 = vld [vmem:[%s142 + $0x350] sm:$0xff]
        %v252 = vld [vmem:[%s142 + $0x358] sm:$0xff]
        %v253 = vld [vmem:[%s142 + $0x360] sm:$0xff]
        %v254 = vld [vmem:[%s142 + $0x368] sm:$0xff]
        %v255 = vld [vmem:[%s142 + $0x370] sm:$0xff]
        %v256 = vld [vmem:[%s142 + $0x378] sm:$0xff]
        %v257 = vld [vmem:[%s142 + $0x380] sm:$0xff]
        %v258 = vld [vmem:[%s142 + $0x388] sm:$0xff]
        %v259 = vld [vmem:[%s142 + $0x390] sm:$0xff]
        %v260 = vld [vmem:[%s142 + $0x398] sm:$0xff]
        %v261 = vld [vmem:[%s142 + $0x3a0] sm:$0xff]
        %v262 = vld [vmem:[%s142 + $0x3a8] sm:$0xff]
        %v263 = vld [vmem:[%s142 + $0x3b0] sm:$0xff]
        %v264 = vld [vmem:[%s142 + $0x3b8] sm:$0xff]
        %v265 = vld [vmem:[%s142 + $0x3c0] sm:$0xff]
        %v266 = vld [vmem:[%s142 + $0x3c8] sm:$0xff]
        %v267 = vld [vmem:[%s142 + $0x3d0] sm:$0xff]
        %v268 = vld [vmem:[%s142 + $0x3d8] sm:$0xff]
        %v269 = vld [vmem:[%s142 + $0x3e0] sm:$0xff]
        %v270 = vld [vmem:[%s142 + $0x3e8] sm:$0xff]
        %v271 = vld [vmem:[%s142 + $0x3f0] sm:$0xff]
        %v272 = vld [vmem:[%s142 + $0x3f8] sm:$0xff]
        %v273 = vld [vmem:[%s1] sm:$0x1]
        %v274 = vld [vmem:[%s1 + $0x1] sm:$0x1]
        %v275 = vld [vmem:[%s1 + $0x2] sm:$0x1]
        %v276 = vld [vmem:[%s1 + $0x3] sm:$0x1]
        %278 = vset.pattern.permute.xlu0 0
        %279 = vperm.xlu0 %278, %v145
        %v280 = vpop.permute.xlu0 %279
        %283 = vset.pattern.permute.xlu0 0
        %284 = vperm.xlu0 %283, %v146
        %v285 = vpop.permute.xlu0 %284
        %288 = vset.pattern.permute.xlu0 0
        %289 = vperm.xlu0 %288, %v147
        %v290 = vpop.permute.xlu0 %289
        %293 = vset.pattern.permute.xlu0 0
        %294 = vperm.xlu0 %293, %v148
        %v295 = vpop.permute.xlu0 %294
        %298 = vset.pattern.permute.xlu0 0
        %299 = vperm.xlu0 %298, %v149
        %v300 = vpop.permute.xlu0 %299
        %303 = vset.pattern.permute.xlu0 0
        %304 = vperm.xlu0 %303, %v150
        %v305 = vpop.permute.xlu0 %304
        %308 = vset.pattern.permute.xlu0 0
        %309 = vperm.xlu0 %308, %v151
        %v310 = vpop.permute.xlu0 %309
        %313 = vset.pattern.permute.xlu0 0
        %314 = vperm.xlu0 %313, %v152
        %v315 = vpop.permute.xlu0 %314
        %318 = vset.pattern.permute.xlu0 0
        %319 = vperm.xlu0 %318, %v153
        %v320 = vpop.permute.xlu0 %319
        %323 = vset.pattern.permute.xlu0 0
        %324 = vperm.xlu0 %323, %v154
        %v325 = vpop.permute.xlu0 %324
        %328 = vset.pattern.permute.xlu0 0
        %329 = vperm.xlu0 %328, %v155
        %v330 = vpop.permute.xlu0 %329
        %333 = vset.pattern.permute.xlu0 0
        %334 = vperm.xlu0 %333, %v156
        %v335 = vpop.permute.xlu0 %334
        %338 = vset.pattern.permute.xlu0 0
        %339 = vperm.xlu0 %338, %v157
        %v340 = vpop.permute.xlu0 %339
        %343 = vset.pattern.permute.xlu0 0
        %344 = vperm.xlu0 %343, %v158
        %v345 = vpop.permute.xlu0 %344
        %348 = vset.pattern.permute.xlu0 0
        %349 = vperm.xlu0 %348, %v159
        %v350 = vpop.permute.xlu0 %349
        %353 = vset.pattern.permute.xlu0 0
        %354 = vperm.xlu0 %353, %v160
        %v355 = vpop.permute.xlu0 %354
        %358 = vset.pattern.permute.xlu0 0
        %359 = vperm.xlu0 %358, %v161
        %v360 = vpop.permute.xlu0 %359
        %363 = vset.pattern.permute.xlu0 0
        %364 = vperm.xlu0 %363, %v162
        %v365 = vpop.permute.xlu0 %364
        %368 = vset.pattern.permute.xlu0 0
        %369 = vperm.xlu0 %368, %v163
        %v370 = vpop.permute.xlu0 %369
        %373 = vset.pattern.permute.xlu0 0
        %374 = vperm.xlu0 %373, %v164
        %v375 = vpop.permute.xlu0 %374
        %378 = vset.pattern.permute.xlu0 0
        %379 = vperm.xlu0 %378, %v165
        %v380 = vpop.permute.xlu0 %379
        %383 = vset.pattern.permute.xlu0 0
        %384 = vperm.xlu0 %383, %v166
        %v385 = vpop.permute.xlu0 %384
        %388 = vset.pattern.permute.xlu0 0
        %389 = vperm.xlu0 %388, %v167
        %v390 = vpop.permute.xlu0 %389
        %393 = vset.pattern.permute.xlu0 0
        %394 = vperm.xlu0 %393, %v168
        %v395 = vpop.permute.xlu0 %394
        %398 = vset.pattern.permute.xlu0 0
        %399 = vperm.xlu0 %398, %v169
        %v400 = vpop.permute.xlu0 %399
        %403 = vset.pattern.permute.xlu0 0
        %404 = vperm.xlu0 %403, %v170
        %v405 = vpop.permute.xlu0 %404
        %408 = vset.pattern.permute.xlu0 0
        %409 = vperm.xlu0 %408, %v171
        %v410 = vpop.permute.xlu0 %409
        %413 = vset.pattern.permute.xlu0 0
        %414 = vperm.xlu0 %413, %v172
        %v415 = vpop.permute.xlu0 %414
        %418 = vset.pattern.permute.xlu0 0
        %419 = vperm.xlu0 %418, %v173
        %v420 = vpop.permute.xlu0 %419
        %423 = vset.pattern.permute.xlu0 0
        %424 = vperm.xlu0 %423, %v174
        %v425 = vpop.permute.xlu0 %424
        %428 = vset.pattern.permute.xlu0 0
        %429 = vperm.xlu0 %428, %v175
        %v430 = vpop.permute.xlu0 %429
        %433 = vset.pattern.permute.xlu0 0
        %434 = vperm.xlu0 %433, %v176
        %v435 = vpop.permute.xlu0 %434
        %438 = vset.pattern.permute.xlu0 0
        %439 = vperm.xlu0 %438, %v177
        %v440 = vpop.permute.xlu0 %439
        %443 = vset.pattern.permute.xlu0 0
        %444 = vperm.xlu0 %443, %v178
        %v445 = vpop.permute.xlu0 %444
        %448 = vset.pattern.permute.xlu0 0
        %449 = vperm.xlu0 %448, %v179
        %v450 = vpop.permute.xlu0 %449
        %453 = vset.pattern.permute.xlu0 0
        %454 = vperm.xlu0 %453, %v180
        %v455 = vpop.permute.xlu0 %454
        %458 = vset.pattern.permute.xlu0 0
        %459 = vperm.xlu0 %458, %v181
        %v460 = vpop.permute.xlu0 %459
        %463 = vset.pattern.permute.xlu0 0
        %464 = vperm.xlu0 %463, %v182
        %v465 = vpop.permute.xlu0 %464
        %468 = vset.pattern.permute.xlu0 0
        %469 = vperm.xlu0 %468, %v183
        %v470 = vpop.permute.xlu0 %469
        %473 = vset.pattern.permute.xlu0 0
        %474 = vperm.xlu0 %473, %v184
        %v475 = vpop.permute.xlu0 %474
        %478 = vset.pattern.permute.xlu0 0
        %479 = vperm.xlu0 %478, %v185
        %v480 = vpop.permute.xlu0 %479
        %483 = vset.pattern.permute.xlu0 0
        %484 = vperm.xlu0 %483, %v186
        %v485 = vpop.permute.xlu0 %484
        %488 = vset.pattern.permute.xlu0 0
        %489 = vperm.xlu0 %488, %v187
        %v490 = vpop.permute.xlu0 %489
        %493 = vset.pattern.permute.xlu0 0
        %494 = vperm.xlu0 %493, %v188
        %v495 = vpop.permute.xlu0 %494
        %498 = vset.pattern.permute.xlu0 0
        %499 = vperm.xlu0 %498, %v189
        %v500 = vpop.permute.xlu0 %499
        %503 = vset.pattern.permute.xlu0 0
        %504 = vperm.xlu0 %503, %v190
        %v505 = vpop.permute.xlu0 %504
        %508 = vset.pattern.permute.xlu0 0
        %509 = vperm.xlu0 %508, %v191
        %v510 = vpop.permute.xlu0 %509
        %513 = vset.pattern.permute.xlu0 0
        %514 = vperm.xlu0 %513, %v192
        %v515 = vpop.permute.xlu0 %514
        %518 = vset.pattern.permute.xlu0 0
        %519 = vperm.xlu0 %518, %v193
        %v520 = vpop.permute.xlu0 %519
        %523 = vset.pattern.permute.xlu0 0
        %524 = vperm.xlu0 %523, %v194
        %v525 = vpop.permute.xlu0 %524
        %528 = vset.pattern.permute.xlu0 0
        %529 = vperm.xlu0 %528, %v195
        %v530 = vpop.permute.xlu0 %529
        %533 = vset.pattern.permute.xlu0 0
        %534 = vperm.xlu0 %533, %v196
        %v535 = vpop.permute.xlu0 %534
        %538 = vset.pattern.permute.xlu0 0
        %539 = vperm.xlu0 %538, %v197
        %v540 = vpop.permute.xlu0 %539
        %543 = vset.pattern.permute.xlu0 0
        %544 = vperm.xlu0 %543, %v198
        %v545 = vpop.permute.xlu0 %544
        %548 = vset.pattern.permute.xlu0 0
        %549 = vperm.xlu0 %548, %v199
        %v550 = vpop.permute.xlu0 %549
        %553 = vset.pattern.permute.xlu0 0
        %554 = vperm.xlu0 %553, %v200
        %v555 = vpop.permute.xlu0 %554
        %558 = vset.pattern.permute.xlu0 0
        %559 = vperm.xlu0 %558, %v201
        %v560 = vpop.permute.xlu0 %559
        %563 = vset.pattern.permute.xlu0 0
        %564 = vperm.xlu0 %563, %v202
        %v565 = vpop.permute.xlu0 %564
        %568 = vset.pattern.permute.xlu0 0
        %569 = vperm.xlu0 %568, %v203
        %v570 = vpop.permute.xlu0 %569
        %573 = vset.pattern.permute.xlu0 0
        %574 = vperm.xlu0 %573, %v204
        %v575 = vpop.permute.xlu0 %574
        %578 = vset.pattern.permute.xlu0 0
        %579 = vperm.xlu0 %578, %v205
        %v580 = vpop.permute.xlu0 %579
        %583 = vset.pattern.permute.xlu0 0
        %584 = vperm.xlu0 %583, %v206
        %v585 = vpop.permute.xlu0 %584
        %588 = vset.pattern.permute.xlu0 0
        %589 = vperm.xlu0 %588, %v207
        %v590 = vpop.permute.xlu0 %589
        %593 = vset.pattern.permute.xlu0 0
        %594 = vperm.xlu0 %593, %v208
        %v595 = vpop.permute.xlu0 %594
        %598 = vset.pattern.permute.xlu0 0
        %599 = vperm.xlu0 %598, %v209
        %v600 = vpop.permute.xlu0 %599
        %603 = vset.pattern.permute.xlu0 0
        %604 = vperm.xlu0 %603, %v210
        %v605 = vpop.permute.xlu0 %604
        %608 = vset.pattern.permute.xlu0 0
        %609 = vperm.xlu0 %608, %v211
        %v610 = vpop.permute.xlu0 %609
        %613 = vset.pattern.permute.xlu0 0
        %614 = vperm.xlu0 %613, %v212
        %v615 = vpop.permute.xlu0 %614
        %618 = vset.pattern.permute.xlu0 0
        %619 = vperm.xlu0 %618, %v213
        %v620 = vpop.permute.xlu0 %619
        %623 = vset.pattern.permute.xlu0 0
        %624 = vperm.xlu0 %623, %v214
        %v625 = vpop.permute.xlu0 %624
        %628 = vset.pattern.permute.xlu0 0
        %629 = vperm.xlu0 %628, %v215
        %v630 = vpop.permute.xlu0 %629
        %633 = vset.pattern.permute.xlu0 0
        %634 = vperm.xlu0 %633, %v216
        %v635 = vpop.permute.xlu0 %634
        %638 = vset.pattern.permute.xlu0 0
        %639 = vperm.xlu0 %638, %v217
        %v640 = vpop.permute.xlu0 %639
        %643 = vset.pattern.permute.xlu0 0
        %644 = vperm.xlu0 %643, %v218
        %v645 = vpop.permute.xlu0 %644
        %648 = vset.pattern.permute.xlu0 0
        %649 = vperm.xlu0 %648, %v219
        %v650 = vpop.permute.xlu0 %649
        %653 = vset.pattern.permute.xlu0 0
        %654 = vperm.xlu0 %653, %v220
        %v655 = vpop.permute.xlu0 %654
        %658 = vset.pattern.permute.xlu0 0
        %659 = vperm.xlu0 %658, %v221
        %v660 = vpop.permute.xlu0 %659
        %663 = vset.pattern.permute.xlu0 0
        %664 = vperm.xlu0 %663, %v222
        %v665 = vpop.permute.xlu0 %664
        %668 = vset.pattern.permute.xlu0 0
        %669 = vperm.xlu0 %668, %v223
        %v670 = vpop.permute.xlu0 %669
        %673 = vset.pattern.permute.xlu0 0
        %674 = vperm.xlu0 %673, %v224
        %v675 = vpop.permute.xlu0 %674
        %678 = vset.pattern.permute.xlu0 0
        %679 = vperm.xlu0 %678, %v225
        %v680 = vpop.permute.xlu0 %679
        %683 = vset.pattern.permute.xlu0 0
        %684 = vperm.xlu0 %683, %v226
        %v685 = vpop.permute.xlu0 %684
        %688 = vset.pattern.permute.xlu0 0
        %689 = vperm.xlu0 %688, %v227
        %v690 = vpop.permute.xlu0 %689
        %693 = vset.pattern.permute.xlu0 0
        %694 = vperm.xlu0 %693, %v228
        %v695 = vpop.permute.xlu0 %694
        %698 = vset.pattern.permute.xlu0 0
        %699 = vperm.xlu0 %698, %v229
        %v700 = vpop.permute.xlu0 %699
        %703 = vset.pattern.permute.xlu0 0
        %704 = vperm.xlu0 %703, %v230
        %v705 = vpop.permute.xlu0 %704
        %708 = vset.pattern.permute.xlu0 0
        %709 = vperm.xlu0 %708, %v231
        %v710 = vpop.permute.xlu0 %709
        %713 = vset.pattern.permute.xlu0 0
        %714 = vperm.xlu0 %713, %v232
        %v715 = vpop.permute.xlu0 %714
        %718 = vset.pattern.permute.xlu0 0
        %719 = vperm.xlu0 %718, %v233
        %v720 = vpop.permute.xlu0 %719
        %723 = vset.pattern.permute.xlu0 0
        %724 = vperm.xlu0 %723, %v234
        %v725 = vpop.permute.xlu0 %724
        %728 = vset.pattern.permute.xlu0 0
        %729 = vperm.xlu0 %728, %v235
        %v730 = vpop.permute.xlu0 %729
        %733 = vset.pattern.permute.xlu0 0
        %734 = vperm.xlu0 %733, %v236
        %v735 = vpop.permute.xlu0 %734
        %738 = vset.pattern.permute.xlu0 0
        %739 = vperm.xlu0 %738, %v237
        %v740 = vpop.permute.xlu0 %739
        %743 = vset.pattern.permute.xlu0 0
        %744 = vperm.xlu0 %743, %v238
        %v745 = vpop.permute.xlu0 %744
        %748 = vset.pattern.permute.xlu0 0
        %749 = vperm.xlu0 %748, %v239
        %v750 = vpop.permute.xlu0 %749
        %753 = vset.pattern.permute.xlu0 0
        %754 = vperm.xlu0 %753, %v240
        %v755 = vpop.permute.xlu0 %754
        %758 = vset.pattern.permute.xlu0 0
        %759 = vperm.xlu0 %758, %v241
        %v760 = vpop.permute.xlu0 %759
        %763 = vset.pattern.permute.xlu0 0
        %764 = vperm.xlu0 %763, %v242
        %v765 = vpop.permute.xlu0 %764
        %768 = vset.pattern.permute.xlu0 0
        %769 = vperm.xlu0 %768, %v243
        %v770 = vpop.permute.xlu0 %769
        %773 = vset.pattern.permute.xlu0 0
        %774 = vperm.xlu0 %773, %v244
        %v775 = vpop.permute.xlu0 %774
        %778 = vset.pattern.permute.xlu0 0
        %779 = vperm.xlu0 %778, %v245
        %v780 = vpop.permute.xlu0 %779
        %783 = vset.pattern.permute.xlu0 0
        %784 = vperm.xlu0 %783, %v246
        %v785 = vpop.permute.xlu0 %784
        %788 = vset.pattern.permute.xlu0 0
        %789 = vperm.xlu0 %788, %v247
        %v790 = vpop.permute.xlu0 %789
        %793 = vset.pattern.permute.xlu0 0
        %794 = vperm.xlu0 %793, %v248
        %v795 = vpop.permute.xlu0 %794
        %798 = vset.pattern.permute.xlu0 0
        %799 = vperm.xlu0 %798, %v249
        %v800 = vpop.permute.xlu0 %799
        %803 = vset.pattern.permute.xlu0 0
        %804 = vperm.xlu0 %803, %v250
        %v805 = vpop.permute.xlu0 %804
        %808 = vset.pattern.permute.xlu0 0
        %809 = vperm.xlu0 %808, %v251
        %v810 = vpop.permute.xlu0 %809
        %813 = vset.pattern.permute.xlu0 0
        %814 = vperm.xlu0 %813, %v252
        %v815 = vpop.permute.xlu0 %814
        %818 = vset.pattern.permute.xlu0 0
        %819 = vperm.xlu0 %818, %v253
        %v820 = vpop.permute.xlu0 %819
        %823 = vset.pattern.permute.xlu0 0
        %824 = vperm.xlu0 %823, %v254
        %v825 = vpop.permute.xlu0 %824
        %828 = vset.pattern.permute.xlu0 0
        %829 = vperm.xlu0 %828, %v255
        %v830 = vpop.permute.xlu0 %829
        %833 = vset.pattern.permute.xlu0 0
        %834 = vperm.xlu0 %833, %v256
        %v835 = vpop.permute.xlu0 %834
        %838 = vset.pattern.permute.xlu0 0
        %839 = vperm.xlu0 %838, %v257
        %v840 = vpop.permute.xlu0 %839
        %843 = vset.pattern.permute.xlu0 0
        %844 = vperm.xlu0 %843, %v258
        %v845 = vpop.permute.xlu0 %844
        %848 = vset.pattern.permute.xlu0 0
        %849 = vperm.xlu0 %848, %v259
        %v850 = vpop.permute.xlu0 %849
        %853 = vset.pattern.permute.xlu0 0
        %854 = vperm.xlu0 %853, %v260
        %v855 = vpop.permute.xlu0 %854
        %858 = vset.pattern.permute.xlu0 0
        %859 = vperm.xlu0 %858, %v261
        %v860 = vpop.permute.xlu0 %859
        %863 = vset.pattern.permute.xlu0 0
        %864 = vperm.xlu0 %863, %v262
        %v865 = vpop.permute.xlu0 %864
        %868 = vset.pattern.permute.xlu0 0
        %869 = vperm.xlu0 %868, %v263
        %v870 = vpop.permute.xlu0 %869
        %873 = vset.pattern.permute.xlu0 0
        %874 = vperm.xlu0 %873, %v264
        %v875 = vpop.permute.xlu0 %874
        %878 = vset.pattern.permute.xlu0 0
        %879 = vperm.xlu0 %878, %v265
        %v880 = vpop.permute.xlu0 %879
        %883 = vset.pattern.permute.xlu0 0
        %884 = vperm.xlu0 %883, %v266
        %v885 = vpop.permute.xlu0 %884
        %888 = vset.pattern.permute.xlu0 0
        %889 = vperm.xlu0 %888, %v267
        %v890 = vpop.permute.xlu0 %889
        %893 = vset.pattern.permute.xlu0 0
        %894 = vperm.xlu0 %893, %v268
        %v895 = vpop.permute.xlu0 %894
        %898 = vset.pattern.permute.xlu0 0
        %899 = vperm.xlu0 %898, %v269
        %v900 = vpop.permute.xlu0 %899
        %903 = vset.pattern.permute.xlu0 0
        %904 = vperm.xlu0 %903, %v270
        %v905 = vpop.permute.xlu0 %904
        %908 = vset.pattern.permute.xlu0 0
        %909 = vperm.xlu0 %908, %v271
        %v910 = vpop.permute.xlu0 %909
        %913 = vset.pattern.permute.xlu0 0
        %914 = vperm.xlu0 %913, %v272
        %v915 = vpop.permute.xlu0 %914
        %v917 = vperm.slane %v273, 0
        %v918 = vmul.f32 %v280, %v917
        %v919 = vmul.f32 %v285, %v917
        %v920 = vmul.f32 %v290, %v917
        %v921 = vmul.f32 %v295, %v917
        %v922 = vmul.f32 %v300, %v917
        %v923 = vmul.f32 %v305, %v917
        %v924 = vmul.f32 %v310, %v917
        %v925 = vmul.f32 %v315, %v917
        %v926 = vmul.f32 %v320, %v917
        %v927 = vmul.f32 %v325, %v917
        %v928 = vmul.f32 %v330, %v917
        %v929 = vmul.f32 %v335, %v917
        %v930 = vmul.f32 %v340, %v917
        %v931 = vmul.f32 %v345, %v917
        %v932 = vmul.f32 %v350, %v917
        %v933 = vmul.f32 %v355, %v917
        %v934 = vmul.f32 %v360, %v917
        %v935 = vmul.f32 %v365, %v917
        %v936 = vmul.f32 %v370, %v917
        %v937 = vmul.f32 %v375, %v917
        %v938 = vmul.f32 %v380, %v917
        %v939 = vmul.f32 %v385, %v917
        %v940 = vmul.f32 %v390, %v917
        %v941 = vmul.f32 %v395, %v917
        %v942 = vmul.f32 %v400, %v917
        %v943 = vmul.f32 %v405, %v917
        %v944 = vmul.f32 %v410, %v917
        %v945 = vmul.f32 %v415, %v917
        %v946 = vmul.f32 %v420, %v917
        %v947 = vmul.f32 %v425, %v917
        %v948 = vmul.f32 %v430, %v917
        %v949 = vmul.f32 %v435, %v917
        %v950 = vmul.f32 %v440, %v917
        %v951 = vmul.f32 %v445, %v917
        %v952 = vmul.f32 %v450, %v917
        %v953 = vmul.f32 %v455, %v917
        %v954 = vmul.f32 %v460, %v917
        %v955 = vmul.f32 %v465, %v917
        %v956 = vmul.f32 %v470, %v917
        %v957 = vmul.f32 %v475, %v917
        %v958 = vmul.f32 %v480, %v917
        %v959 = vmul.f32 %v485, %v917
        %v960 = vmul.f32 %v490, %v917
        %v961 = vmul.f32 %v495, %v917
        %v962 = vmul.f32 %v500, %v917
        %v963 = vmul.f32 %v505, %v917
        %v964 = vmul.f32 %v510, %v917
        %v965 = vmul.f32 %v515, %v917
        %v966 = vmul.f32 %v520, %v917
        %v967 = vmul.f32 %v525, %v917
        %v968 = vmul.f32 %v530, %v917
        %v969 = vmul.f32 %v535, %v917
        %v970 = vmul.f32 %v540, %v917
        %v971 = vmul.f32 %v545, %v917
        %v972 = vmul.f32 %v550, %v917
        %v973 = vmul.f32 %v555, %v917
        %v974 = vmul.f32 %v560, %v917
        %v975 = vmul.f32 %v565, %v917
        %v976 = vmul.f32 %v570, %v917
        %v977 = vmul.f32 %v575, %v917
        %v978 = vmul.f32 %v580, %v917
        %v979 = vmul.f32 %v585, %v917
        %v980 = vmul.f32 %v590, %v917
        %v981 = vmul.f32 %v595, %v917
        %v982 = vmul.f32 %v600, %v917
        %v983 = vmul.f32 %v605, %v917
        %v984 = vmul.f32 %v610, %v917
        %v985 = vmul.f32 %v615, %v917
        %v986 = vmul.f32 %v620, %v917
        %v987 = vmul.f32 %v625, %v917
        %v988 = vmul.f32 %v630, %v917
        %v989 = vmul.f32 %v635, %v917
        %v990 = vmul.f32 %v640, %v917
        %v991 = vmul.f32 %v645, %v917
        %v992 = vmul.f32 %v650, %v917
        %v993 = vmul.f32 %v655, %v917
        %v994 = vmul.f32 %v660, %v917
        %v995 = vmul.f32 %v665, %v917
        %v996 = vmul.f32 %v670, %v917
        %v997 = vmul.f32 %v675, %v917
        %v998 = vmul.f32 %v680, %v917
        %v999 = vmul.f32 %v685, %v917
        %v1000 = vmul.f32 %v690, %v917
        %v1001 = vmul.f32 %v695, %v917
        %v1002 = vmul.f32 %v700, %v917
        %v1003 = vmul.f32 %v705, %v917
        %v1004 = vmul.f32 %v710, %v917
        %v1005 = vmul.f32 %v715, %v917
        %v1006 = vmul.f32 %v720, %v917
        %v1007 = vmul.f32 %v725, %v917
        %v1008 = vmul.f32 %v730, %v917
        %v1009 = vmul.f32 %v735, %v917
        %v1010 = vmul.f32 %v740, %v917
        %v1011 = vmul.f32 %v745, %v917
        %v1012 = vmul.f32 %v750, %v917
        %v1013 = vmul.f32 %v755, %v917
        %v1014 = vmul.f32 %v760, %v917
        %v1015 = vmul.f32 %v765, %v917
        %v1016 = vmul.f32 %v770, %v917
        %v1017 = vmul.f32 %v775, %v917
        %v1018 = vmul.f32 %v780, %v917
        %v1019 = vmul.f32 %v785, %v917
        %v1020 = vmul.f32 %v790, %v917
        %v1021 = vmul.f32 %v795, %v917
        %v1022 = vmul.f32 %v800, %v917
        %v1023 = vmul.f32 %v805, %v917
        %v1024 = vmul.f32 %v810, %v917
        %v1025 = vmul.f32 %v815, %v917
        %v1026 = vmul.f32 %v820, %v917
        %v1027 = vmul.f32 %v825, %v917
        %v1028 = vmul.f32 %v830, %v917
        %v1029 = vmul.f32 %v835, %v917
        %v1030 = vmul.f32 %v840, %v917
        %v1031 = vmul.f32 %v845, %v917
        %v1032 = vmul.f32 %v850, %v917
        %v1033 = vmul.f32 %v855, %v917
        %v1034 = vmul.f32 %v860, %v917
        %v1035 = vmul.f32 %v865, %v917
        %v1036 = vmul.f32 %v870, %v917
        %v1037 = vmul.f32 %v875, %v917
        %v1038 = vmul.f32 %v880, %v917
        %v1039 = vmul.f32 %v885, %v917
        %v1040 = vmul.f32 %v890, %v917
        %v1041 = vmul.f32 %v895, %v917
        %v1042 = vmul.f32 %v900, %v917
        %v1043 = vmul.f32 %v905, %v917
        %v1044 = vmul.f32 %v910, %v917
        %v1045 = vmul.f32 %v915, %v917
        %v1046 = vperm.slane %v275, 0
        %v1047 = vadd.f32 %v918, %v1046
        %v1048 = vadd.f32 %v919, %v1046
        %v1049 = vadd.f32 %v920, %v1046
        %v1050 = vadd.f32 %v921, %v1046
        %v1051 = vadd.f32 %v922, %v1046
        %v1052 = vadd.f32 %v923, %v1046
        %v1053 = vadd.f32 %v924, %v1046
        %v1054 = vadd.f32 %v925, %v1046
        %v1055 = vadd.f32 %v926, %v1046
        %v1056 = vadd.f32 %v927, %v1046
        %v1057 = vadd.f32 %v928, %v1046
        %v1058 = vadd.f32 %v929, %v1046
        %v1059 = vadd.f32 %v930, %v1046
        %v1060 = vadd.f32 %v931, %v1046
        %v1061 = vadd.f32 %v932, %v1046
        %v1062 = vadd.f32 %v933, %v1046
        %v1063 = vadd.f32 %v934, %v1046
        %v1064 = vadd.f32 %v935, %v1046
        %v1065 = vadd.f32 %v936, %v1046
        %v1066 = vadd.f32 %v937, %v1046
        %v1067 = vadd.f32 %v938, %v1046
        %v1068 = vadd.f32 %v939, %v1046
        %v1069 = vadd.f32 %v940, %v1046
        %v1070 = vadd.f32 %v941, %v1046
        %v1071 = vadd.f32 %v942, %v1046
        %v1072 = vadd.f32 %v943, %v1046
        %v1073 = vadd.f32 %v944, %v1046
        %v1074 = vadd.f32 %v945, %v1046
        %v1075 = vadd.f32 %v946, %v1046
        %v1076 = vadd.f32 %v947, %v1046
        %v1077 = vadd.f32 %v948, %v1046
        %v1078 = vadd.f32 %v949, %v1046
        %v1079 = vadd.f32 %v950, %v1046
        %v1080 = vadd.f32 %v951, %v1046
        %v1081 = vadd.f32 %v952, %v1046
        %v1082 = vadd.f32 %v953, %v1046
        %v1083 = vadd.f32 %v954, %v1046
        %v1084 = vadd.f32 %v955, %v1046
        %v1085 = vadd.f32 %v956, %v1046
        %v1086 = vadd.f32 %v957, %v1046
        %v1087 = vadd.f32 %v958, %v1046
        %v1088 = vadd.f32 %v959, %v1046
        %v1089 = vadd.f32 %v960, %v1046
        %v1090 = vadd.f32 %v961, %v1046
        %v1091 = vadd.f32 %v962, %v1046
        %v1092 = vadd.f32 %v963, %v1046
        %v1093 = vadd.f32 %v964, %v1046
        %v1094 = vadd.f32 %v965, %v1046
        %v1095 = vadd.f32 %v966, %v1046
        %v1096 = vadd.f32 %v967, %v1046
        %v1097 = vadd.f32 %v968, %v1046
        %v1098 = vadd.f32 %v969, %v1046
        %v1099 = vadd.f32 %v970, %v1046
        %v1100 = vadd.f32 %v971, %v1046
        %v1101 = vadd.f32 %v972, %v1046
        %v1102 = vadd.f32 %v973, %v1046
        %v1103 = vadd.f32 %v974, %v1046
        %v1104 = vadd.f32 %v975, %v1046
        %v1105 = vadd.f32 %v976, %v1046
        %v1106 = vadd.f32 %v977, %v1046
        %v1107 = vadd.f32 %v978, %v1046
        %v1108 = vadd.f32 %v979, %v1046
        %v1109 = vadd.f32 %v980, %v1046
        %v1110 = vadd.f32 %v981, %v1046
        %v1111 = vadd.f32 %v982, %v1046
        %v1112 = vadd.f32 %v983, %v1046
        %v1113 = vadd.f32 %v984, %v1046
        %v1114 = vadd.f32 %v985, %v1046
        %v1115 = vadd.f32 %v986, %v1046
        %v1116 = vadd.f32 %v987, %v1046
        %v1117 = vadd.f32 %v988, %v1046
        %v1118 = vadd.f32 %v989, %v1046
        %v1119 = vadd.f32 %v990, %v1046
        %v1120 = vadd.f32 %v991, %v1046
        %v1121 = vadd.f32 %v992, %v1046
        %v1122 = vadd.f32 %v993, %v1046
        %v1123 = vadd.f32 %v994, %v1046
        %v1124 = vadd.f32 %v995, %v1046
        %v1125 = vadd.f32 %v996, %v1046
        %v1126 = vadd.f32 %v997, %v1046
        %v1127 = vadd.f32 %v998, %v1046
        %v1128 = vadd.f32 %v999, %v1046
        %v1129 = vadd.f32 %v1000, %v1046
        %v1130 = vadd.f32 %v1001, %v1046
        %v1131 = vadd.f32 %v1002, %v1046
        %v1132 = vadd.f32 %v1003, %v1046
        %v1133 = vadd.f32 %v1004, %v1046
        %v1134 = vadd.f32 %v1005, %v1046
        %v1135 = vadd.f32 %v1006, %v1046
        %v1136 = vadd.f32 %v1007, %v1046
        %v1137 = vadd.f32 %v1008, %v1046
        %v1138 = vadd.f32 %v1009, %v1046
        %v1139 = vadd.f32 %v1010, %v1046
        %v1140 = vadd.f32 %v1011, %v1046
        %v1141 = vadd.f32 %v1012, %v1046
        %v1142 = vadd.f32 %v1013, %v1046
        %v1143 = vadd.f32 %v1014, %v1046
        %v1144 = vadd.f32 %v1015, %v1046
        %v1145 = vadd.f32 %v1016, %v1046
        %v1146 = vadd.f32 %v1017, %v1046
        %v1147 = vadd.f32 %v1018, %v1046
        %v1148 = vadd.f32 %v1019, %v1046
        %v1149 = vadd.f32 %v1020, %v1046
        %v1150 = vadd.f32 %v1021, %v1046
        %v1151 = vadd.f32 %v1022, %v1046
        %v1152 = vadd.f32 %v1023, %v1046
        %v1153 = vadd.f32 %v1024, %v1046
        %v1154 = vadd.f32 %v1025, %v1046
        %v1155 = vadd.f32 %v1026, %v1046
        %v1156 = vadd.f32 %v1027, %v1046
        %v1157 = vadd.f32 %v1028, %v1046
        %v1158 = vadd.f32 %v1029, %v1046
        %v1159 = vadd.f32 %v1030, %v1046
        %v1160 = vadd.f32 %v1031, %v1046
        %v1161 = vadd.f32 %v1032, %v1046
        %v1162 = vadd.f32 %v1033, %v1046
        %v1163 = vadd.f32 %v1034, %v1046
        %v1164 = vadd.f32 %v1035, %v1046
        %v1165 = vadd.f32 %v1036, %v1046
        %v1166 = vadd.f32 %v1037, %v1046
        %v1167 = vadd.f32 %v1038, %v1046
        %v1168 = vadd.f32 %v1039, %v1046
        %v1169 = vadd.f32 %v1040, %v1046
        %v1170 = vadd.f32 %v1041, %v1046
        %v1171 = vadd.f32 %v1042, %v1046
        %v1172 = vadd.f32 %v1043, %v1046
        %v1173 = vadd.f32 %v1044, %v1046
        %v1174 = vadd.f32 %v1045, %v1046
        %v1175 = vperm.slane %v274, 0
        %v1176 = vmul.f32 %v280, %v1175
        %v1177 = vmul.f32 %v285, %v1175
        %v1178 = vmul.f32 %v290, %v1175
        %v1179 = vmul.f32 %v295, %v1175
        %v1180 = vmul.f32 %v300, %v1175
        %v1181 = vmul.f32 %v305, %v1175
        %v1182 = vmul.f32 %v310, %v1175
        %v1183 = vmul.f32 %v315, %v1175
        %v1184 = vmul.f32 %v320, %v1175
        %v1185 = vmul.f32 %v325, %v1175
        %v1186 = vmul.f32 %v330, %v1175
        %v1187 = vmul.f32 %v335, %v1175
        %v1188 = vmul.f32 %v340, %v1175
        %v1189 = vmul.f32 %v345, %v1175
        %v1190 = vmul.f32 %v350, %v1175
        %v1191 = vmul.f32 %v355, %v1175
        %v1192 = vmul.f32 %v360, %v1175
        %v1193 = vmul.f32 %v365, %v1175
        %v1194 = vmul.f32 %v370, %v1175
        %v1195 = vmul.f32 %v375, %v1175
        %v1196 = vmul.f32 %v380, %v1175
        %v1197 = vmul.f32 %v385, %v1175
        %v1198 = vmul.f32 %v390, %v1175
        %v1199 = vmul.f32 %v395, %v1175
        %v1200 = vmul.f32 %v400, %v1175
        %v1201 = vmul.f32 %v405, %v1175
        %v1202 = vmul.f32 %v410, %v1175
        %v1203 = vmul.f32 %v415, %v1175
        %v1204 = vmul.f32 %v420, %v1175
        %v1205 = vmul.f32 %v425, %v1175
        %v1206 = vmul.f32 %v430, %v1175
        %v1207 = vmul.f32 %v435, %v1175
        %v1208 = vmul.f32 %v440, %v1175
        %v1209 = vmul.f32 %v445, %v1175
        %v1210 = vmul.f32 %v450, %v1175
        %v1211 = vmul.f32 %v455, %v1175
        %v1212 = vmul.f32 %v460, %v1175
        %v1213 = vmul.f32 %v465, %v1175
        %v1214 = vmul.f32 %v470, %v1175
        %v1215 = vmul.f32 %v475, %v1175
        %v1216 = vmul.f32 %v480, %v1175
        %v1217 = vmul.f32 %v485, %v1175
        %v1218 = vmul.f32 %v490, %v1175
        %v1219 = vmul.f32 %v495, %v1175
        %v1220 = vmul.f32 %v500, %v1175
        %v1221 = vmul.f32 %v505, %v1175
        %v1222 = vmul.f32 %v510, %v1175
        %v1223 = vmul.f32 %v515, %v1175
        %v1224 = vmul.f32 %v520, %v1175
        %v1225 = vmul.f32 %v525, %v1175
        %v1226 = vmul.f32 %v530, %v1175
        %v1227 = vmul.f32 %v535, %v1175
        %v1228 = vmul.f32 %v540, %v1175
        %v1229 = vmul.f32 %v545, %v1175
        %v1230 = vmul.f32 %v550, %v1175
        %v1231 = vmul.f32 %v555, %v1175
        %v1232 = vmul.f32 %v560, %v1175
        %v1233 = vmul.f32 %v565, %v1175
        %v1234 = vmul.f32 %v570, %v1175
        %v1235 = vmul.f32 %v575, %v1175
        %v1236 = vmul.f32 %v580, %v1175
        %v1237 = vmul.f32 %v585, %v1175
        %v1238 = vmul.f32 %v590, %v1175
        %v1239 = vmul.f32 %v595, %v1175
        %v1240 = vmul.f32 %v600, %v1175
        %v1241 = vmul.f32 %v605, %v1175
        %v1242 = vmul.f32 %v610, %v1175
        %v1243 = vmul.f32 %v615, %v1175
        %v1244 = vmul.f32 %v620, %v1175
        %v1245 = vmul.f32 %v625, %v1175
        %v1246 = vmul.f32 %v630, %v1175
        %v1247 = vmul.f32 %v635, %v1175
        %v1248 = vmul.f32 %v640, %v1175
        %v1249 = vmul.f32 %v645, %v1175
        %v1250 = vmul.f32 %v650, %v1175
        %v1251 = vmul.f32 %v655, %v1175
        %v1252 = vmul.f32 %v660, %v1175
        %v1253 = vmul.f32 %v665, %v1175
        %v1254 = vmul.f32 %v670, %v1175
        %v1255 = vmul.f32 %v675, %v1175
        %v1256 = vmul.f32 %v680, %v1175
        %v1257 = vmul.f32 %v685, %v1175
        %v1258 = vmul.f32 %v690, %v1175
        %v1259 = vmul.f32 %v695, %v1175
        %v1260 = vmul.f32 %v700, %v1175
        %v1261 = vmul.f32 %v705, %v1175
        %v1262 = vmul.f32 %v710, %v1175
        %v1263 = vmul.f32 %v715, %v1175
        %v1264 = vmul.f32 %v720, %v1175
        %v1265 = vmul.f32 %v725, %v1175
        %v1266 = vmul.f32 %v730, %v1175
        %v1267 = vmul.f32 %v735, %v1175
        %v1268 = vmul.f32 %v740, %v1175
        %v1269 = vmul.f32 %v745, %v1175
        %v1270 = vmul.f32 %v750, %v1175
        %v1271 = vmul.f32 %v755, %v1175
        %v1272 = vmul.f32 %v760, %v1175
        %v1273 = vmul.f32 %v765, %v1175
        %v1274 = vmul.f32 %v770, %v1175
        %v1275 = vmul.f32 %v775, %v1175
        %v1276 = vmul.f32 %v780, %v1175
        %v1277 = vmul.f32 %v785, %v1175
        %v1278 = vmul.f32 %v790, %v1175
        %v1279 = vmul.f32 %v795, %v1175
        %v1280 = vmul.f32 %v800, %v1175
        %v1281 = vmul.f32 %v805, %v1175
        %v1282 = vmul.f32 %v810, %v1175
        %v1283 = vmul.f32 %v815, %v1175
        %v1284 = vmul.f32 %v820, %v1175
        %v1285 = vmul.f32 %v825, %v1175
        %v1286 = vmul.f32 %v830, %v1175
        %v1287 = vmul.f32 %v835, %v1175
        %v1288 = vmul.f32 %v840, %v1175
        %v1289 = vmul.f32 %v845, %v1175
        %v1290 = vmul.f32 %v850, %v1175
        %v1291 = vmul.f32 %v855, %v1175
        %v1292 = vmul.f32 %v860, %v1175
        %v1293 = vmul.f32 %v865, %v1175
        %v1294 = vmul.f32 %v870, %v1175
        %v1295 = vmul.f32 %v875, %v1175
        %v1296 = vmul.f32 %v880, %v1175
        %v1297 = vmul.f32 %v885, %v1175
        %v1298 = vmul.f32 %v890, %v1175
        %v1299 = vmul.f32 %v895, %v1175
        %v1300 = vmul.f32 %v900, %v1175
        %v1301 = vmul.f32 %v905, %v1175
        %v1302 = vmul.f32 %v910, %v1175
        %v1303 = vmul.f32 %v915, %v1175
        %v1304 = vperm.slane %v276, 0
        %v1305 = vadd.f32 %v1176, %v1304
        %v1306 = vadd.f32 %v1177, %v1304
        %v1307 = vadd.f32 %v1178, %v1304
        %v1308 = vadd.f32 %v1179, %v1304
        %v1309 = vadd.f32 %v1180, %v1304
        %v1310 = vadd.f32 %v1181, %v1304
        %v1311 = vadd.f32 %v1182, %v1304
        %v1312 = vadd.f32 %v1183, %v1304
        %v1313 = vadd.f32 %v1184, %v1304
        %v1314 = vadd.f32 %v1185, %v1304
        %v1315 = vadd.f32 %v1186, %v1304
        %v1316 = vadd.f32 %v1187, %v1304
        %v1317 = vadd.f32 %v1188, %v1304
        %v1318 = vadd.f32 %v1189, %v1304
        %v1319 = vadd.f32 %v1190, %v1304
        %v1320 = vadd.f32 %v1191, %v1304
        %v1321 = vadd.f32 %v1192, %v1304
        %v1322 = vadd.f32 %v1193, %v1304
        %v1323 = vadd.f32 %v1194, %v1304
        %v1324 = vadd.f32 %v1195, %v1304
        %v1325 = vadd.f32 %v1196, %v1304
        %v1326 = vadd.f32 %v1197, %v1304
        %v1327 = vadd.f32 %v1198, %v1304
        %v1328 = vadd.f32 %v1199, %v1304
        %v1329 = vadd.f32 %v1200, %v1304
        %v1330 = vadd.f32 %v1201, %v1304
        %v1331 = vadd.f32 %v1202, %v1304
        %v1332 = vadd.f32 %v1203, %v1304
        %v1333 = vadd.f32 %v1204, %v1304
        %v1334 = vadd.f32 %v1205, %v1304
        %v1335 = vadd.f32 %v1206, %v1304
        %v1336 = vadd.f32 %v1207, %v1304
        %v1337 = vadd.f32 %v1208, %v1304
        %v1338 = vadd.f32 %v1209, %v1304
        %v1339 = vadd.f32 %v1210, %v1304
        %v1340 = vadd.f32 %v1211, %v1304
        %v1341 = vadd.f32 %v1212, %v1304
        %v1342 = vadd.f32 %v1213, %v1304
        %v1343 = vadd.f32 %v1214, %v1304
        %v1344 = vadd.f32 %v1215, %v1304
        %v1345 = vadd.f32 %v1216, %v1304
        %v1346 = vadd.f32 %v1217, %v1304
        %v1347 = vadd.f32 %v1218, %v1304
        %v1348 = vadd.f32 %v1219, %v1304
        %v1349 = vadd.f32 %v1220, %v1304
        %v1350 = vadd.f32 %v1221, %v1304
        %v1351 = vadd.f32 %v1222, %v1304
        %v1352 = vadd.f32 %v1223, %v1304
        %v1353 = vadd.f32 %v1224, %v1304
        %v1354 = vadd.f32 %v1225, %v1304
        %v1355 = vadd.f32 %v1226, %v1304
        %v1356 = vadd.f32 %v1227, %v1304
        %v1357 = vadd.f32 %v1228, %v1304
        %v1358 = vadd.f32 %v1229, %v1304
        %v1359 = vadd.f32 %v1230, %v1304
        %v1360 = vadd.f32 %v1231, %v1304
        %v1361 = vadd.f32 %v1232, %v1304
        %v1362 = vadd.f32 %v1233, %v1304
        %v1363 = vadd.f32 %v1234, %v1304
        %v1364 = vadd.f32 %v1235, %v1304
        %v1365 = vadd.f32 %v1236, %v1304
        %v1366 = vadd.f32 %v1237, %v1304
        %v1367 = vadd.f32 %v1238, %v1304
        %v1368 = vadd.f32 %v1239, %v1304
        %v1369 = vadd.f32 %v1240, %v1304
        %v1370 = vadd.f32 %v1241, %v1304
        %v1371 = vadd.f32 %v1242, %v1304
        %v1372 = vadd.f32 %v1243, %v1304
        %v1373 = vadd.f32 %v1244, %v1304
        %v1374 = vadd.f32 %v1245, %v1304
        %v1375 = vadd.f32 %v1246, %v1304
        %v1376 = vadd.f32 %v1247, %v1304
        %v1377 = vadd.f32 %v1248, %v1304
        %v1378 = vadd.f32 %v1249, %v1304
        %v1379 = vadd.f32 %v1250, %v1304
        %v1380 = vadd.f32 %v1251, %v1304
        %v1381 = vadd.f32 %v1252, %v1304
        %v1382 = vadd.f32 %v1253, %v1304
        %v1383 = vadd.f32 %v1254, %v1304
        %v1384 = vadd.f32 %v1255, %v1304
        %v1385 = vadd.f32 %v1256, %v1304
        %v1386 = vadd.f32 %v1257, %v1304
        %v1387 = vadd.f32 %v1258, %v1304
        %v1388 = vadd.f32 %v1259, %v1304
        %v1389 = vadd.f32 %v1260, %v1304
        %v1390 = vadd.f32 %v1261, %v1304
        %v1391 = vadd.f32 %v1262, %v1304
        %v1392 = vadd.f32 %v1263, %v1304
        %v1393 = vadd.f32 %v1264, %v1304
        %v1394 = vadd.f32 %v1265, %v1304
        %v1395 = vadd.f32 %v1266, %v1304
        %v1396 = vadd.f32 %v1267, %v1304
        %v1397 = vadd.f32 %v1268, %v1304
        %v1398 = vadd.f32 %v1269, %v1304
        %v1399 = vadd.f32 %v1270, %v1304
        %v1400 = vadd.f32 %v1271, %v1304
        %v1401 = vadd.f32 %v1272, %v1304
        %v1402 = vadd.f32 %v1273, %v1304
        %v1403 = vadd.f32 %v1274, %v1304
        %v1404 = vadd.f32 %v1275, %v1304
        %v1405 = vadd.f32 %v1276, %v1304
        %v1406 = vadd.f32 %v1277, %v1304
        %v1407 = vadd.f32 %v1278, %v1304
        %v1408 = vadd.f32 %v1279, %v1304
        %v1409 = vadd.f32 %v1280, %v1304
        %v1410 = vadd.f32 %v1281, %v1304
        %v1411 = vadd.f32 %v1282, %v1304
        %v1412 = vadd.f32 %v1283, %v1304
        %v1413 = vadd.f32 %v1284, %v1304
        %v1414 = vadd.f32 %v1285, %v1304
        %v1415 = vadd.f32 %v1286, %v1304
        %v1416 = vadd.f32 %v1287, %v1304
        %v1417 = vadd.f32 %v1288, %v1304
        %v1418 = vadd.f32 %v1289, %v1304
        %v1419 = vadd.f32 %v1290, %v1304
        %v1420 = vadd.f32 %v1291, %v1304
        %v1421 = vadd.f32 %v1292, %v1304
        %v1422 = vadd.f32 %v1293, %v1304
        %v1423 = vadd.f32 %v1294, %v1304
        %v1424 = vadd.f32 %v1295, %v1304
        %v1425 = vadd.f32 %v1296, %v1304
        %v1426 = vadd.f32 %v1297, %v1304
        %v1427 = vadd.f32 %v1298, %v1304
        %v1428 = vadd.f32 %v1299, %v1304
        %v1429 = vadd.f32 %v1300, %v1304
        %v1430 = vadd.f32 %v1301, %v1304
        %v1431 = vadd.f32 %v1302, %v1304
        %v1432 = vadd.f32 %v1303, %v1304
        %1433 = vset.pattern.permute.xlu0 3
        %1434 = vperm.xlu0 %1433, %v145
        %v1435 = vpop.permute.xlu0 %1434
        %1437 = vset.pattern.permute.xlu0 3
        %1438 = vperm.xlu0 %1437, %v146
        %v1439 = vpop.permute.xlu0 %1438
        %1441 = vset.pattern.permute.xlu0 3
        %1442 = vperm.xlu0 %1441, %v147
        %v1443 = vpop.permute.xlu0 %1442
        %1445 = vset.pattern.permute.xlu0 3
        %1446 = vperm.xlu0 %1445, %v148
        %v1447 = vpop.permute.xlu0 %1446
        %1449 = vset.pattern.permute.xlu0 3
        %1450 = vperm.xlu0 %1449, %v149
        %v1451 = vpop.permute.xlu0 %1450
        %1453 = vset.pattern.permute.xlu0 3
        %1454 = vperm.xlu0 %1453, %v150
        %v1455 = vpop.permute.xlu0 %1454
        %1457 = vset.pattern.permute.xlu0 3
        %1458 = vperm.xlu0 %1457, %v151
        %v1459 = vpop.permute.xlu0 %1458
        %1461 = vset.pattern.permute.xlu0 3
        %1462 = vperm.xlu0 %1461, %v152
        %v1463 = vpop.permute.xlu0 %1462
        %1465 = vset.pattern.permute.xlu0 3
        %1466 = vperm.xlu0 %1465, %v153
        %v1467 = vpop.permute.xlu0 %1466
        %1469 = vset.pattern.permute.xlu0 3
        %1470 = vperm.xlu0 %1469, %v154
        %v1471 = vpop.permute.xlu0 %1470
        %1473 = vset.pattern.permute.xlu0 3
        %1474 = vperm.xlu0 %1473, %v155
        %v1475 = vpop.permute.xlu0 %1474
        %1477 = vset.pattern.permute.xlu0 3
        %1478 = vperm.xlu0 %1477, %v156
        %v1479 = vpop.permute.xlu0 %1478
        %1481 = vset.pattern.permute.xlu0 3
        %1482 = vperm.xlu0 %1481, %v157
        %v1483 = vpop.permute.xlu0 %1482
        %1485 = vset.pattern.permute.xlu0 3
        %1486 = vperm.xlu0 %1485, %v158
        %v1487 = vpop.permute.xlu0 %1486
        %1489 = vset.pattern.permute.xlu0 3
        %1490 = vperm.xlu0 %1489, %v159
        %v1491 = vpop.permute.xlu0 %1490
        %1493 = vset.pattern.permute.xlu0 3
        %1494 = vperm.xlu0 %1493, %v160
        %v1495 = vpop.permute.xlu0 %1494
        %1497 = vset.pattern.permute.xlu0 3
        %1498 = vperm.xlu0 %1497, %v161
        %v1499 = vpop.permute.xlu0 %1498
        %1501 = vset.pattern.permute.xlu0 3
        %1502 = vperm.xlu0 %1501, %v162
        %v1503 = vpop.permute.xlu0 %1502
        %1505 = vset.pattern.permute.xlu0 3
        %1506 = vperm.xlu0 %1505, %v163
        %v1507 = vpop.permute.xlu0 %1506
        %1509 = vset.pattern.permute.xlu0 3
        %1510 = vperm.xlu0 %1509, %v164
        %v1511 = vpop.permute.xlu0 %1510
        %1513 = vset.pattern.permute.xlu0 3
        %1514 = vperm.xlu0 %1513, %v165
        %v1515 = vpop.permute.xlu0 %1514
        %1517 = vset.pattern.permute.xlu0 3
        %1518 = vperm.xlu0 %1517, %v166
        %v1519 = vpop.permute.xlu0 %1518
        %1521 = vset.pattern.permute.xlu0 3
        %1522 = vperm.xlu0 %1521, %v167
        %v1523 = vpop.permute.xlu0 %1522
        %1525 = vset.pattern.permute.xlu0 3
        %1526 = vperm.xlu0 %1525, %v168
        %v1527 = vpop.permute.xlu0 %1526
        %1529 = vset.pattern.permute.xlu0 3
        %1530 = vperm.xlu0 %1529, %v169
        %v1531 = vpop.permute.xlu0 %1530
        %1533 = vset.pattern.permute.xlu0 3
        %1534 = vperm.xlu0 %1533, %v170
        %v1535 = vpop.permute.xlu0 %1534
        %1537 = vset.pattern.permute.xlu0 3
        %1538 = vperm.xlu0 %1537, %v171
        %v1539 = vpop.permute.xlu0 %1538
        %1541 = vset.pattern.permute.xlu0 3
        %1542 = vperm.xlu0 %1541, %v172
        %v1543 = vpop.permute.xlu0 %1542
        %1545 = vset.pattern.permute.xlu0 3
        %1546 = vperm.xlu0 %1545, %v173
        %v1547 = vpop.permute.xlu0 %1546
        %1549 = vset.pattern.permute.xlu0 3
        %1550 = vperm.xlu0 %1549, %v174
        %v1551 = vpop.permute.xlu0 %1550
        %1553 = vset.pattern.permute.xlu0 3
        %1554 = vperm.xlu0 %1553, %v175
        %v1555 = vpop.permute.xlu0 %1554
        %1557 = vset.pattern.permute.xlu0 3
        %1558 = vperm.xlu0 %1557, %v176
        %v1559 = vpop.permute.xlu0 %1558
        %1561 = vset.pattern.permute.xlu0 3
        %1562 = vperm.xlu0 %1561, %v177
        %v1563 = vpop.permute.xlu0 %1562
        %1565 = vset.pattern.permute.xlu0 3
        %1566 = vperm.xlu0 %1565, %v178
        %v1567 = vpop.permute.xlu0 %1566
        %1569 = vset.pattern.permute.xlu0 3
        %1570 = vperm.xlu0 %1569, %v179
        %v1571 = vpop.permute.xlu0 %1570
        %1573 = vset.pattern.permute.xlu0 3
        %1574 = vperm.xlu0 %1573, %v180
        %v1575 = vpop.permute.xlu0 %1574
        %1577 = vset.pattern.permute.xlu0 3
        %1578 = vperm.xlu0 %1577, %v181
        %v1579 = vpop.permute.xlu0 %1578
        %1581 = vset.pattern.permute.xlu0 3
        %1582 = vperm.xlu0 %1581, %v182
        %v1583 = vpop.permute.xlu0 %1582
        %1585 = vset.pattern.permute.xlu0 3
        %1586 = vperm.xlu0 %1585, %v183
        %v1587 = vpop.permute.xlu0 %1586
        %1589 = vset.pattern.permute.xlu0 3
        %1590 = vperm.xlu0 %1589, %v184
        %v1591 = vpop.permute.xlu0 %1590
        %1593 = vset.pattern.permute.xlu0 3
        %1594 = vperm.xlu0 %1593, %v185
        %v1595 = vpop.permute.xlu0 %1594
        %1597 = vset.pattern.permute.xlu0 3
        %1598 = vperm.xlu0 %1597, %v186
        %v1599 = vpop.permute.xlu0 %1598
        %1601 = vset.pattern.permute.xlu0 3
        %1602 = vperm.xlu0 %1601, %v187
        %v1603 = vpop.permute.xlu0 %1602
        %1605 = vset.pattern.permute.xlu0 3
        %1606 = vperm.xlu0 %1605, %v188
        %v1607 = vpop.permute.xlu0 %1606
        %1609 = vset.pattern.permute.xlu0 3
        %1610 = vperm.xlu0 %1609, %v189
        %v1611 = vpop.permute.xlu0 %1610
        %1613 = vset.pattern.permute.xlu0 3
        %1614 = vperm.xlu0 %1613, %v190
        %v1615 = vpop.permute.xlu0 %1614
        %1617 = vset.pattern.permute.xlu0 3
        %1618 = vperm.xlu0 %1617, %v191
        %v1619 = vpop.permute.xlu0 %1618
        %1621 = vset.pattern.permute.xlu0 3
        %1622 = vperm.xlu0 %1621, %v192
        %v1623 = vpop.permute.xlu0 %1622
        %1625 = vset.pattern.permute.xlu0 3
        %1626 = vperm.xlu0 %1625, %v193
        %v1627 = vpop.permute.xlu0 %1626
        %1629 = vset.pattern.permute.xlu0 3
        %1630 = vperm.xlu0 %1629, %v194
        %v1631 = vpop.permute.xlu0 %1630
        %1633 = vset.pattern.permute.xlu0 3
        %1634 = vperm.xlu0 %1633, %v195
        %v1635 = vpop.permute.xlu0 %1634
        %1637 = vset.pattern.permute.xlu0 3
        %1638 = vperm.xlu0 %1637, %v196
        %v1639 = vpop.permute.xlu0 %1638
        %1641 = vset.pattern.permute.xlu0 3
        %1642 = vperm.xlu0 %1641, %v197
        %v1643 = vpop.permute.xlu0 %1642
        %1645 = vset.pattern.permute.xlu0 3
        %1646 = vperm.xlu0 %1645, %v198
        %v1647 = vpop.permute.xlu0 %1646
        %1649 = vset.pattern.permute.xlu0 3
        %1650 = vperm.xlu0 %1649, %v199
        %v1651 = vpop.permute.xlu0 %1650
        %1653 = vset.pattern.permute.xlu0 3
        %1654 = vperm.xlu0 %1653, %v200
        %v1655 = vpop.permute.xlu0 %1654
        %1657 = vset.pattern.permute.xlu0 3
        %1658 = vperm.xlu0 %1657, %v201
        %v1659 = vpop.permute.xlu0 %1658
        %1661 = vset.pattern.permute.xlu0 3
        %1662 = vperm.xlu0 %1661, %v202
        %v1663 = vpop.permute.xlu0 %1662
        %1665 = vset.pattern.permute.xlu0 3
        %1666 = vperm.xlu0 %1665, %v203
        %v1667 = vpop.permute.xlu0 %1666
        %1669 = vset.pattern.permute.xlu0 3
        %1670 = vperm.xlu0 %1669, %v204
        %v1671 = vpop.permute.xlu0 %1670
        %1673 = vset.pattern.permute.xlu0 3
        %1674 = vperm.xlu0 %1673, %v205
        %v1675 = vpop.permute.xlu0 %1674
        %1677 = vset.pattern.permute.xlu0 3
        %1678 = vperm.xlu0 %1677, %v206
        %v1679 = vpop.permute.xlu0 %1678
        %1681 = vset.pattern.permute.xlu0 3
        %1682 = vperm.xlu0 %1681, %v207
        %v1683 = vpop.permute.xlu0 %1682
        %1685 = vset.pattern.permute.xlu0 3
        %1686 = vperm.xlu0 %1685, %v208
        %v1687 = vpop.permute.xlu0 %1686
        %1689 = vset.pattern.permute.xlu0 3
        %1690 = vperm.xlu0 %1689, %v209
        %v1691 = vpop.permute.xlu0 %1690
        %1693 = vset.pattern.permute.xlu0 3
        %1694 = vperm.xlu0 %1693, %v210
        %v1695 = vpop.permute.xlu0 %1694
        %1697 = vset.pattern.permute.xlu0 3
        %1698 = vperm.xlu0 %1697, %v211
        %v1699 = vpop.permute.xlu0 %1698
        %1701 = vset.pattern.permute.xlu0 3
        %1702 = vperm.xlu0 %1701, %v212
        %v1703 = vpop.permute.xlu0 %1702
        %1705 = vset.pattern.permute.xlu0 3
        %1706 = vperm.xlu0 %1705, %v213
        %v1707 = vpop.permute.xlu0 %1706
        %1709 = vset.pattern.permute.xlu0 3
        %1710 = vperm.xlu0 %1709, %v214
        %v1711 = vpop.permute.xlu0 %1710
        %1713 = vset.pattern.permute.xlu0 3
        %1714 = vperm.xlu0 %1713, %v215
        %v1715 = vpop.permute.xlu0 %1714
        %1717 = vset.pattern.permute.xlu0 3
        %1718 = vperm.xlu0 %1717, %v216
        %v1719 = vpop.permute.xlu0 %1718
        %1721 = vset.pattern.permute.xlu0 3
        %1722 = vperm.xlu0 %1721, %v217
        %v1723 = vpop.permute.xlu0 %1722
        %1725 = vset.pattern.permute.xlu0 3
        %1726 = vperm.xlu0 %1725, %v218
        %v1727 = vpop.permute.xlu0 %1726
        %1729 = vset.pattern.permute.xlu0 3
        %1730 = vperm.xlu0 %1729, %v219
        %v1731 = vpop.permute.xlu0 %1730
        %1733 = vset.pattern.permute.xlu0 3
        %1734 = vperm.xlu0 %1733, %v220
        %v1735 = vpop.permute.xlu0 %1734
        %1737 = vset.pattern.permute.xlu0 3
        %1738 = vperm.xlu0 %1737, %v221
        %v1739 = vpop.permute.xlu0 %1738
        %1741 = vset.pattern.permute.xlu0 3
        %1742 = vperm.xlu0 %1741, %v222
        %v1743 = vpop.permute.xlu0 %1742
        %1745 = vset.pattern.permute.xlu0 3
        %1746 = vperm.xlu0 %1745, %v223
        %v1747 = vpop.permute.xlu0 %1746
        %1749 = vset.pattern.permute.xlu0 3
        %1750 = vperm.xlu0 %1749, %v224
        %v1751 = vpop.permute.xlu0 %1750
        %1753 = vset.pattern.permute.xlu0 3
        %1754 = vperm.xlu0 %1753, %v225
        %v1755 = vpop.permute.xlu0 %1754
        %1757 = vset.pattern.permute.xlu0 3
        %1758 = vperm.xlu0 %1757, %v226
        %v1759 = vpop.permute.xlu0 %1758
        %1761 = vset.pattern.permute.xlu0 3
        %1762 = vperm.xlu0 %1761, %v227
        %v1763 = vpop.permute.xlu0 %1762
        %1765 = vset.pattern.permute.xlu0 3
        %1766 = vperm.xlu0 %1765, %v228
        %v1767 = vpop.permute.xlu0 %1766
        %1769 = vset.pattern.permute.xlu0 3
        %1770 = vperm.xlu0 %1769, %v229
        %v1771 = vpop.permute.xlu0 %1770
        %1773 = vset.pattern.permute.xlu0 3
        %1774 = vperm.xlu0 %1773, %v230
        %v1775 = vpop.permute.xlu0 %1774
        %1777 = vset.pattern.permute.xlu0 3
        %1778 = vperm.xlu0 %1777, %v231
        %v1779 = vpop.permute.xlu0 %1778
        %1781 = vset.pattern.permute.xlu0 3
        %1782 = vperm.xlu0 %1781, %v232
        %v1783 = vpop.permute.xlu0 %1782
        %1785 = vset.pattern.permute.xlu0 3
        %1786 = vperm.xlu0 %1785, %v233
        %v1787 = vpop.permute.xlu0 %1786
        %1789 = vset.pattern.permute.xlu0 3
        %1790 = vperm.xlu0 %1789, %v234
        %v1791 = vpop.permute.xlu0 %1790
        %1793 = vset.pattern.permute.xlu0 3
        %1794 = vperm.xlu0 %1793, %v235
        %v1795 = vpop.permute.xlu0 %1794
        %1797 = vset.pattern.permute.xlu0 3
        %1798 = vperm.xlu0 %1797, %v236
        %v1799 = vpop.permute.xlu0 %1798
        %1801 = vset.pattern.permute.xlu0 3
        %1802 = vperm.xlu0 %1801, %v237
        %v1803 = vpop.permute.xlu0 %1802
        %1805 = vset.pattern.permute.xlu0 3
        %1806 = vperm.xlu0 %1805, %v238
        %v1807 = vpop.permute.xlu0 %1806
        %1809 = vset.pattern.permute.xlu0 3
        %1810 = vperm.xlu0 %1809, %v239
        %v1811 = vpop.permute.xlu0 %1810
        %1813 = vset.pattern.permute.xlu0 3
        %1814 = vperm.xlu0 %1813, %v240
        %v1815 = vpop.permute.xlu0 %1814
        %1817 = vset.pattern.permute.xlu0 3
        %1818 = vperm.xlu0 %1817, %v241
        %v1819 = vpop.permute.xlu0 %1818
        %1821 = vset.pattern.permute.xlu0 3
        %1822 = vperm.xlu0 %1821, %v242
        %v1823 = vpop.permute.xlu0 %1822
        %1825 = vset.pattern.permute.xlu0 3
        %1826 = vperm.xlu0 %1825, %v243
        %v1827 = vpop.permute.xlu0 %1826
        %1829 = vset.pattern.permute.xlu0 3
        %1830 = vperm.xlu0 %1829, %v244
        %v1831 = vpop.permute.xlu0 %1830
        %1833 = vset.pattern.permute.xlu0 3
        %1834 = vperm.xlu0 %1833, %v245
        %v1835 = vpop.permute.xlu0 %1834
        %1837 = vset.pattern.permute.xlu0 3
        %1838 = vperm.xlu0 %1837, %v246
        %v1839 = vpop.permute.xlu0 %1838
        %1841 = vset.pattern.permute.xlu0 3
        %1842 = vperm.xlu0 %1841, %v247
        %v1843 = vpop.permute.xlu0 %1842
        %1845 = vset.pattern.permute.xlu0 3
        %1846 = vperm.xlu0 %1845, %v248
        %v1847 = vpop.permute.xlu0 %1846
        %1849 = vset.pattern.permute.xlu0 3
        %1850 = vperm.xlu0 %1849, %v249
        %v1851 = vpop.permute.xlu0 %1850
        %1853 = vset.pattern.permute.xlu0 3
        %1854 = vperm.xlu0 %1853, %v250
        %v1855 = vpop.permute.xlu0 %1854
        %1857 = vset.pattern.permute.xlu0 3
        %1858 = vperm.xlu0 %1857, %v251
        %v1859 = vpop.permute.xlu0 %1858
        %1861 = vset.pattern.permute.xlu0 3
        %1862 = vperm.xlu0 %1861, %v252
        %v1863 = vpop.permute.xlu0 %1862
        %1865 = vset.pattern.permute.xlu0 3
        %1866 = vperm.xlu0 %1865, %v253
        %v1867 = vpop.permute.xlu0 %1866
        %1869 = vset.pattern.permute.xlu0 3
        %1870 = vperm.xlu0 %1869, %v254
        %v1871 = vpop.permute.xlu0 %1870
        %1873 = vset.pattern.permute.xlu0 3
        %1874 = vperm.xlu0 %1873, %v255
        %v1875 = vpop.permute.xlu0 %1874
        %1877 = vset.pattern.permute.xlu0 3
        %1878 = vperm.xlu0 %1877, %v256
        %v1879 = vpop.permute.xlu0 %1878
        %1881 = vset.pattern.permute.xlu0 3
        %1882 = vperm.xlu0 %1881, %v257
        %v1883 = vpop.permute.xlu0 %1882
        %1885 = vset.pattern.permute.xlu0 3
        %1886 = vperm.xlu0 %1885, %v258
        %v1887 = vpop.permute.xlu0 %1886
        %1889 = vset.pattern.permute.xlu0 3
        %1890 = vperm.xlu0 %1889, %v259
        %v1891 = vpop.permute.xlu0 %1890
        %1893 = vset.pattern.permute.xlu0 3
        %1894 = vperm.xlu0 %1893, %v260
        %v1895 = vpop.permute.xlu0 %1894
        %1897 = vset.pattern.permute.xlu0 3
        %1898 = vperm.xlu0 %1897, %v261
        %v1899 = vpop.permute.xlu0 %1898
        %1901 = vset.pattern.permute.xlu0 3
        %1902 = vperm.xlu0 %1901, %v262
        %v1903 = vpop.permute.xlu0 %1902
        %1905 = vset.pattern.permute.xlu0 3
        %1906 = vperm.xlu0 %1905, %v263
        %v1907 = vpop.permute.xlu0 %1906
        %1909 = vset.pattern.permute.xlu0 3
        %1910 = vperm.xlu0 %1909, %v264
        %v1911 = vpop.permute.xlu0 %1910
        %1913 = vset.pattern.permute.xlu0 3
        %1914 = vperm.xlu0 %1913, %v265
        %v1915 = vpop.permute.xlu0 %1914
        %1917 = vset.pattern.permute.xlu0 3
        %1918 = vperm.xlu0 %1917, %v266
        %v1919 = vpop.permute.xlu0 %1918
        %1921 = vset.pattern.permute.xlu0 3
        %1922 = vperm.xlu0 %1921, %v267
        %v1923 = vpop.permute.xlu0 %1922
        %1925 = vset.pattern.permute.xlu0 3
        %1926 = vperm.xlu0 %1925, %v268
        %v1927 = vpop.permute.xlu0 %1926
        %1929 = vset.pattern.permute.xlu0 3
        %1930 = vperm.xlu0 %1929, %v269
        %v1931 = vpop.permute.xlu0 %1930
        %1933 = vset.pattern.permute.xlu0 3
        %1934 = vperm.xlu0 %1933, %v270
        %v1935 = vpop.permute.xlu0 %1934
        %1937 = vset.pattern.permute.xlu0 3
        %1938 = vperm.xlu0 %1937, %v271
        %v1939 = vpop.permute.xlu0 %1938
        %1941 = vset.pattern.permute.xlu0 3
        %1942 = vperm.xlu0 %1941, %v272
        %v1943 = vpop.permute.xlu0 %1942
        %v1945 = vmul.f32 %v1047, %v1435
        %v1946 = vmul.f32 %v1048, %v1439
        %v1947 = vmul.f32 %v1049, %v1443
        %v1948 = vmul.f32 %v1050, %v1447
        %v1949 = vmul.f32 %v1051, %v1451
        %v1950 = vmul.f32 %v1052, %v1455
        %v1951 = vmul.f32 %v1053, %v1459
        %v1952 = vmul.f32 %v1054, %v1463
        %v1953 = vmul.f32 %v1055, %v1467
        %v1954 = vmul.f32 %v1056, %v1471
        %v1955 = vmul.f32 %v1057, %v1475
        %v1956 = vmul.f32 %v1058, %v1479
        %v1957 = vmul.f32 %v1059, %v1483
        %v1958 = vmul.f32 %v1060, %v1487
        %v1959 = vmul.f32 %v1061, %v1491
        %v1960 = vmul.f32 %v1062, %v1495
        %v1961 = vmul.f32 %v1063, %v1499
        %v1962 = vmul.f32 %v1064, %v1503
        %v1963 = vmul.f32 %v1065, %v1507
        %v1964 = vmul.f32 %v1066, %v1511
        %v1965 = vmul.f32 %v1067, %v1515
        %v1966 = vmul.f32 %v1068, %v1519
        %v1967 = vmul.f32 %v1069, %v1523
        %v1968 = vmul.f32 %v1070, %v1527
        %v1969 = vmul.f32 %v1071, %v1531
        %v1970 = vmul.f32 %v1072, %v1535
        %v1971 = vmul.f32 %v1073, %v1539
        %v1972 = vmul.f32 %v1074, %v1543
        %v1973 = vmul.f32 %v1075, %v1547
        %v1974 = vmul.f32 %v1076, %v1551
        %v1975 = vmul.f32 %v1077, %v1555
        %v1976 = vmul.f32 %v1078, %v1559
        %v1977 = vmul.f32 %v1079, %v1563
        %v1978 = vmul.f32 %v1080, %v1567
        %v1979 = vmul.f32 %v1081, %v1571
        %v1980 = vmul.f32 %v1082, %v1575
        %v1981 = vmul.f32 %v1083, %v1579
        %v1982 = vmul.f32 %v1084, %v1583
        %v1983 = vmul.f32 %v1085, %v1587
        %v1984 = vmul.f32 %v1086, %v1591
        %v1985 = vmul.f32 %v1087, %v1595
        %v1986 = vmul.f32 %v1088, %v1599
        %v1987 = vmul.f32 %v1089, %v1603
        %v1988 = vmul.f32 %v1090, %v1607
        %v1989 = vmul.f32 %v1091, %v1611
        %v1990 = vmul.f32 %v1092, %v1615
        %v1991 = vmul.f32 %v1093, %v1619
        %v1992 = vmul.f32 %v1094, %v1623
        %v1993 = vmul.f32 %v1095, %v1627
        %v1994 = vmul.f32 %v1096, %v1631
        %v1995 = vmul.f32 %v1097, %v1635
        %v1996 = vmul.f32 %v1098, %v1639
        %v1997 = vmul.f32 %v1099, %v1643
        %v1998 = vmul.f32 %v1100, %v1647
        %v1999 = vmul.f32 %v1101, %v1651
        %v2000 = vmul.f32 %v1102, %v1655
        %v2001 = vmul.f32 %v1103, %v1659
        %v2002 = vmul.f32 %v1104, %v1663
        %v2003 = vmul.f32 %v1105, %v1667
        %v2004 = vmul.f32 %v1106, %v1671
        %v2005 = vmul.f32 %v1107, %v1675
        %v2006 = vmul.f32 %v1108, %v1679
        %v2007 = vmul.f32 %v1109, %v1683
        %v2008 = vmul.f32 %v1110, %v1687
        %v2009 = vmul.f32 %v1111, %v1691
        %v2010 = vmul.f32 %v1112, %v1695
        %v2011 = vmul.f32 %v1113, %v1699
        %v2012 = vmul.f32 %v1114, %v1703
        %v2013 = vmul.f32 %v1115, %v1707
        %v2014 = vmul.f32 %v1116, %v1711
        %v2015 = vmul.f32 %v1117, %v1715
        %v2016 = vmul.f32 %v1118, %v1719
        %v2017 = vmul.f32 %v1119, %v1723
        %v2018 = vmul.f32 %v1120, %v1727
        %v2019 = vmul.f32 %v1121, %v1731
        %v2020 = vmul.f32 %v1122, %v1735
        %v2021 = vmul.f32 %v1123, %v1739
        %v2022 = vmul.f32 %v1124, %v1743
        %v2023 = vmul.f32 %v1125, %v1747
        %v2024 = vmul.f32 %v1126, %v1751
        %v2025 = vmul.f32 %v1127, %v1755
        %v2026 = vmul.f32 %v1128, %v1759
        %v2027 = vmul.f32 %v1129, %v1763
        %v2028 = vmul.f32 %v1130, %v1767
        %v2029 = vmul.f32 %v1131, %v1771
        %v2030 = vmul.f32 %v1132, %v1775
        %v2031 = vmul.f32 %v1133, %v1779
        %v2032 = vmul.f32 %v1134, %v1783
        %v2033 = vmul.f32 %v1135, %v1787
        %v2034 = vmul.f32 %v1136, %v1791
        %v2035 = vmul.f32 %v1137, %v1795
        %v2036 = vmul.f32 %v1138, %v1799
        %v2037 = vmul.f32 %v1139, %v1803
        %v2038 = vmul.f32 %v1140, %v1807
        %v2039 = vmul.f32 %v1141, %v1811
        %v2040 = vmul.f32 %v1142, %v1815
        %v2041 = vmul.f32 %v1143, %v1819
        %v2042 = vmul.f32 %v1144, %v1823
        %v2043 = vmul.f32 %v1145, %v1827
        %v2044 = vmul.f32 %v1146, %v1831
        %v2045 = vmul.f32 %v1147, %v1835
        %v2046 = vmul.f32 %v1148, %v1839
        %v2047 = vmul.f32 %v1149, %v1843
        %v2048 = vmul.f32 %v1150, %v1847
        %v2049 = vmul.f32 %v1151, %v1851
        %v2050 = vmul.f32 %v1152, %v1855
        %v2051 = vmul.f32 %v1153, %v1859
        %v2052 = vmul.f32 %v1154, %v1863
        %v2053 = vmul.f32 %v1155, %v1867
        %v2054 = vmul.f32 %v1156, %v1871
        %v2055 = vmul.f32 %v1157, %v1875
        %v2056 = vmul.f32 %v1158, %v1879
        %v2057 = vmul.f32 %v1159, %v1883
        %v2058 = vmul.f32 %v1160, %v1887
        %v2059 = vmul.f32 %v1161, %v1891
        %v2060 = vmul.f32 %v1162, %v1895
        %v2061 = vmul.f32 %v1163, %v1899
        %v2062 = vmul.f32 %v1164, %v1903
        %v2063 = vmul.f32 %v1165, %v1907
        %v2064 = vmul.f32 %v1166, %v1911
        %v2065 = vmul.f32 %v1167, %v1915
        %v2066 = vmul.f32 %v1168, %v1919
        %v2067 = vmul.f32 %v1169, %v1923
        %v2068 = vmul.f32 %v1170, %v1927
        %v2069 = vmul.f32 %v1171, %v1931
        %v2070 = vmul.f32 %v1172, %v1935
        %v2071 = vmul.f32 %v1173, %v1939
        %v2072 = vmul.f32 %v1174, %v1943
        %v2073 = vsub.f32 1.0, %v145
        %v2074 = vsub.f32 1.0, %v146
        %v2075 = vsub.f32 1.0, %v147
        %v2076 = vsub.f32 1.0, %v148
        %v2077 = vsub.f32 1.0, %v149
        %v2078 = vsub.f32 1.0, %v150
        %v2079 = vsub.f32 1.0, %v151
        %v2080 = vsub.f32 1.0, %v152
        %v2081 = vsub.f32 1.0, %v153
        %v2082 = vsub.f32 1.0, %v154
        %v2083 = vsub.f32 1.0, %v155
        %v2084 = vsub.f32 1.0, %v156
        %v2085 = vsub.f32 1.0, %v157
        %v2086 = vsub.f32 1.0, %v158
        %v2087 = vsub.f32 1.0, %v159
        %v2088 = vsub.f32 1.0, %v160
        %v2089 = vsub.f32 1.0, %v161
        %v2090 = vsub.f32 1.0, %v162
        %v2091 = vsub.f32 1.0, %v163
        %v2092 = vsub.f32 1.0, %v164
        %v2093 = vsub.f32 1.0, %v165
        %v2094 = vsub.f32 1.0, %v166
        %v2095 = vsub.f32 1.0, %v167
        %v2096 = vsub.f32 1.0, %v168
        %v2097 = vsub.f32 1.0, %v169
        %v2098 = vsub.f32 1.0, %v170
        %v2099 = vsub.f32 1.0, %v171
        %v2100 = vsub.f32 1.0, %v172
        %v2101 = vsub.f32 1.0, %v173
        %v2102 = vsub.f32 1.0, %v174
        %v2103 = vsub.f32 1.0, %v175
        %v2104 = vsub.f32 1.0, %v176
        %v2105 = vsub.f32 1.0, %v177
        %v2106 = vsub.f32 1.0, %v178
        %v2107 = vsub.f32 1.0, %v179
        %v2108 = vsub.f32 1.0, %v180
        %v2109 = vsub.f32 1.0, %v181
        %v2110 = vsub.f32 1.0, %v182
        %v2111 = vsub.f32 1.0, %v183
        %v2112 = vsub.f32 1.0, %v184
        %v2113 = vsub.f32 1.0, %v185
        %v2114 = vsub.f32 1.0, %v186
        %v2115 = vsub.f32 1.0, %v187
        %v2116 = vsub.f32 1.0, %v188
        %v2117 = vsub.f32 1.0, %v189
        %v2118 = vsub.f32 1.0, %v190
        %v2119 = vsub.f32 1.0, %v191
        %v2120 = vsub.f32 1.0, %v192
        %v2121 = vsub.f32 1.0, %v193
        %v2122 = vsub.f32 1.0, %v194
        %v2123 = vsub.f32 1.0, %v195
        %v2124 = vsub.f32 1.0, %v196
        %v2125 = vsub.f32 1.0, %v197
        %v2126 = vsub.f32 1.0, %v198
        %v2127 = vsub.f32 1.0, %v199
        %v2128 = vsub.f32 1.0, %v200
        %v2129 = vsub.f32 1.0, %v201
        %v2130 = vsub.f32 1.0, %v202
        %v2131 = vsub.f32 1.0, %v203
        %v2132 = vsub.f32 1.0, %v204
        %v2133 = vsub.f32 1.0, %v205
        %v2134 = vsub.f32 1.0, %v206
        %v2135 = vsub.f32 1.0, %v207
        %v2136 = vsub.f32 1.0, %v208
        %v2137 = vsub.f32 1.0, %v209
        %v2138 = vsub.f32 1.0, %v210
        %v2139 = vsub.f32 1.0, %v211
        %v2140 = vsub.f32 1.0, %v212
        %v2141 = vsub.f32 1.0, %v213
        %v2142 = vsub.f32 1.0, %v214
        %v2143 = vsub.f32 1.0, %v215
        %v2144 = vsub.f32 1.0, %v216
        %v2145 = vsub.f32 1.0, %v217
        %v2146 = vsub.f32 1.0, %v218
        %v2147 = vsub.f32 1.0, %v219
        %v2148 = vsub.f32 1.0, %v220
        %v2149 = vsub.f32 1.0, %v221
        %v2150 = vsub.f32 1.0, %v222
        %v2151 = vsub.f32 1.0, %v223
        %v2152 = vsub.f32 1.0, %v224
        %v2153 = vsub.f32 1.0, %v225
        %v2154 = vsub.f32 1.0, %v226
        %v2155 = vsub.f32 1.0, %v227
        %v2156 = vsub.f32 1.0, %v228
        %v2157 = vsub.f32 1.0, %v229
        %v2158 = vsub.f32 1.0, %v230
        %v2159 = vsub.f32 1.0, %v231
        %v2160 = vsub.f32 1.0, %v232
        %v2161 = vsub.f32 1.0, %v233
        %v2162 = vsub.f32 1.0, %v234
        %v2163 = vsub.f32 1.0, %v235
        %v2164 = vsub.f32 1.0, %v236
        %v2165 = vsub.f32 1.0, %v237
        %v2166 = vsub.f32 1.0, %v238
        %v2167 = vsub.f32 1.0, %v239
        %v2168 = vsub.f32 1.0, %v240
        %v2169 = vsub.f32 1.0, %v241
        %v2170 = vsub.f32 1.0, %v242
        %v2171 = vsub.f32 1.0, %v243
        %v2172 = vsub.f32 1.0, %v244
        %v2173 = vsub.f32 1.0, %v245
        %v2174 = vsub.f32 1.0, %v246
        %v2175 = vsub.f32 1.0, %v247
        %v2176 = vsub.f32 1.0, %v248
        %v2177 = vsub.f32 1.0, %v249
        %v2178 = vsub.f32 1.0, %v250
        %v2179 = vsub.f32 1.0, %v251
        %v2180 = vsub.f32 1.0, %v252
        %v2181 = vsub.f32 1.0, %v253
        %v2182 = vsub.f32 1.0, %v254
        %v2183 = vsub.f32 1.0, %v255
        %v2184 = vsub.f32 1.0, %v256
        %v2185 = vsub.f32 1.0, %v257
        %v2186 = vsub.f32 1.0, %v258
        %v2187 = vsub.f32 1.0, %v259
        %v2188 = vsub.f32 1.0, %v260
        %v2189 = vsub.f32 1.0, %v261
        %v2190 = vsub.f32 1.0, %v262
        %v2191 = vsub.f32 1.0, %v263
        %v2192 = vsub.f32 1.0, %v264
        %v2193 = vsub.f32 1.0, %v265
        %v2194 = vsub.f32 1.0, %v266
        %v2195 = vsub.f32 1.0, %v267
        %v2196 = vsub.f32 1.0, %v268
        %v2197 = vsub.f32 1.0, %v269
        %v2198 = vsub.f32 1.0, %v270
        %v2199 = vsub.f32 1.0, %v271
        %v2200 = vsub.f32 1.0, %v272
        %2202 = vset.pattern.permute.xlu0 3
        %2203 = vperm.xlu0 %2202, %v2073
        %v2204 = vpop.permute.xlu0 %2203
        %2207 = vset.pattern.permute.xlu0 3
        %2208 = vperm.xlu0 %2207, %v2074
        %v2209 = vpop.permute.xlu0 %2208
        %2212 = vset.pattern.permute.xlu0 3
        %2213 = vperm.xlu0 %2212, %v2075
        %v2214 = vpop.permute.xlu0 %2213
        %2217 = vset.pattern.permute.xlu0 3
        %2218 = vperm.xlu0 %2217, %v2076
        %v2219 = vpop.permute.xlu0 %2218
        %2222 = vset.pattern.permute.xlu0 3
        %2223 = vperm.xlu0 %2222, %v2077
        %v2224 = vpop.permute.xlu0 %2223
        %2227 = vset.pattern.permute.xlu0 3
        %2228 = vperm.xlu0 %2227, %v2078
        %v2229 = vpop.permute.xlu0 %2228
        %2232 = vset.pattern.permute.xlu0 3
        %2233 = vperm.xlu0 %2232, %v2079
        %v2234 = vpop.permute.xlu0 %2233
        %2237 = vset.pattern.permute.xlu0 3
        %2238 = vperm.xlu0 %2237, %v2080
        %v2239 = vpop.permute.xlu0 %2238
        %2242 = vset.pattern.permute.xlu0 3
        %2243 = vperm.xlu0 %2242, %v2081
        %v2244 = vpop.permute.xlu0 %2243
        %2247 = vset.pattern.permute.xlu0 3
        %2248 = vperm.xlu0 %2247, %v2082
        %v2249 = vpop.permute.xlu0 %2248
        %2252 = vset.pattern.permute.xlu0 3
        %2253 = vperm.xlu0 %2252, %v2083
        %v2254 = vpop.permute.xlu0 %2253
        %2257 = vset.pattern.permute.xlu0 3
        %2258 = vperm.xlu0 %2257, %v2084
        %v2259 = vpop.permute.xlu0 %2258
        %2262 = vset.pattern.permute.xlu0 3
        %2263 = vperm.xlu0 %2262, %v2085
        %v2264 = vpop.permute.xlu0 %2263
        %2267 = vset.pattern.permute.xlu0 3
        %2268 = vperm.xlu0 %2267, %v2086
        %v2269 = vpop.permute.xlu0 %2268
        %2272 = vset.pattern.permute.xlu0 3
        %2273 = vperm.xlu0 %2272, %v2087
        %v2274 = vpop.permute.xlu0 %2273
        %2277 = vset.pattern.permute.xlu0 3
        %2278 = vperm.xlu0 %2277, %v2088
        %v2279 = vpop.permute.xlu0 %2278
        %2282 = vset.pattern.permute.xlu0 3
        %2283 = vperm.xlu0 %2282, %v2089
        %v2284 = vpop.permute.xlu0 %2283
        %2287 = vset.pattern.permute.xlu0 3
        %2288 = vperm.xlu0 %2287, %v2090
        %v2289 = vpop.permute.xlu0 %2288
        %2292 = vset.pattern.permute.xlu0 3
        %2293 = vperm.xlu0 %2292, %v2091
        %v2294 = vpop.permute.xlu0 %2293
        %2297 = vset.pattern.permute.xlu0 3
        %2298 = vperm.xlu0 %2297, %v2092
        %v2299 = vpop.permute.xlu0 %2298
        %2302 = vset.pattern.permute.xlu0 3
        %2303 = vperm.xlu0 %2302, %v2093
        %v2304 = vpop.permute.xlu0 %2303
        %2307 = vset.pattern.permute.xlu0 3
        %2308 = vperm.xlu0 %2307, %v2094
        %v2309 = vpop.permute.xlu0 %2308
        %2312 = vset.pattern.permute.xlu0 3
        %2313 = vperm.xlu0 %2312, %v2095
        %v2314 = vpop.permute.xlu0 %2313
        %2317 = vset.pattern.permute.xlu0 3
        %2318 = vperm.xlu0 %2317, %v2096
        %v2319 = vpop.permute.xlu0 %2318
        %2322 = vset.pattern.permute.xlu0 3
        %2323 = vperm.xlu0 %2322, %v2097
        %v2324 = vpop.permute.xlu0 %2323
        %2327 = vset.pattern.permute.xlu0 3
        %2328 = vperm.xlu0 %2327, %v2098
        %v2329 = vpop.permute.xlu0 %2328
        %2332 = vset.pattern.permute.xlu0 3
        %2333 = vperm.xlu0 %2332, %v2099
        %v2334 = vpop.permute.xlu0 %2333
        %2337 = vset.pattern.permute.xlu0 3
        %2338 = vperm.xlu0 %2337, %v2100
        %v2339 = vpop.permute.xlu0 %2338
        %2342 = vset.pattern.permute.xlu0 3
        %2343 = vperm.xlu0 %2342, %v2101
        %v2344 = vpop.permute.xlu0 %2343
        %2347 = vset.pattern.permute.xlu0 3
        %2348 = vperm.xlu0 %2347, %v2102
        %v2349 = vpop.permute.xlu0 %2348
        %2352 = vset.pattern.permute.xlu0 3
        %2353 = vperm.xlu0 %2352, %v2103
        %v2354 = vpop.permute.xlu0 %2353
        %2357 = vset.pattern.permute.xlu0 3
        %2358 = vperm.xlu0 %2357, %v2104
        %v2359 = vpop.permute.xlu0 %2358
        %2362 = vset.pattern.permute.xlu0 3
        %2363 = vperm.xlu0 %2362, %v2105
        %v2364 = vpop.permute.xlu0 %2363
        %2367 = vset.pattern.permute.xlu0 3
        %2368 = vperm.xlu0 %2367, %v2106
        %v2369 = vpop.permute.xlu0 %2368
        %2372 = vset.pattern.permute.xlu0 3
        %2373 = vperm.xlu0 %2372, %v2107
        %v2374 = vpop.permute.xlu0 %2373
        %2377 = vset.pattern.permute.xlu0 3
        %2378 = vperm.xlu0 %2377, %v2108
        %v2379 = vpop.permute.xlu0 %2378
        %2382 = vset.pattern.permute.xlu0 3
        %2383 = vperm.xlu0 %2382, %v2109
        %v2384 = vpop.permute.xlu0 %2383
        %2387 = vset.pattern.permute.xlu0 3
        %2388 = vperm.xlu0 %2387, %v2110
        %v2389 = vpop.permute.xlu0 %2388
        %2392 = vset.pattern.permute.xlu0 3
        %2393 = vperm.xlu0 %2392, %v2111
        %v2394 = vpop.permute.xlu0 %2393
        %2397 = vset.pattern.permute.xlu0 3
        %2398 = vperm.xlu0 %2397, %v2112
        %v2399 = vpop.permute.xlu0 %2398
        %2402 = vset.pattern.permute.xlu0 3
        %2403 = vperm.xlu0 %2402, %v2113
        %v2404 = vpop.permute.xlu0 %2403
        %2407 = vset.pattern.permute.xlu0 3
        %2408 = vperm.xlu0 %2407, %v2114
        %v2409 = vpop.permute.xlu0 %2408
        %2412 = vset.pattern.permute.xlu0 3
        %2413 = vperm.xlu0 %2412, %v2115
        %v2414 = vpop.permute.xlu0 %2413
        %2417 = vset.pattern.permute.xlu0 3
        %2418 = vperm.xlu0 %2417, %v2116
        %v2419 = vpop.permute.xlu0 %2418
        %2422 = vset.pattern.permute.xlu0 3
        %2423 = vperm.xlu0 %2422, %v2117
        %v2424 = vpop.permute.xlu0 %2423
        %2427 = vset.pattern.permute.xlu0 3
        %2428 = vperm.xlu0 %2427, %v2118
        %v2429 = vpop.permute.xlu0 %2428
        %2432 = vset.pattern.permute.xlu0 3
        %2433 = vperm.xlu0 %2432, %v2119
        %v2434 = vpop.permute.xlu0 %2433
        %2437 = vset.pattern.permute.xlu0 3
        %2438 = vperm.xlu0 %2437, %v2120
        %v2439 = vpop.permute.xlu0 %2438
        %2442 = vset.pattern.permute.xlu0 3
        %2443 = vperm.xlu0 %2442, %v2121
        %v2444 = vpop.permute.xlu0 %2443
        %2447 = vset.pattern.permute.xlu0 3
        %2448 = vperm.xlu0 %2447, %v2122
        %v2449 = vpop.permute.xlu0 %2448
        %2452 = vset.pattern.permute.xlu0 3
        %2453 = vperm.xlu0 %2452, %v2123
        %v2454 = vpop.permute.xlu0 %2453
        %2457 = vset.pattern.permute.xlu0 3
        %2458 = vperm.xlu0 %2457, %v2124
        %v2459 = vpop.permute.xlu0 %2458
        %2462 = vset.pattern.permute.xlu0 3
        %2463 = vperm.xlu0 %2462, %v2125
        %v2464 = vpop.permute.xlu0 %2463
        %2467 = vset.pattern.permute.xlu0 3
        %2468 = vperm.xlu0 %2467, %v2126
        %v2469 = vpop.permute.xlu0 %2468
        %2472 = vset.pattern.permute.xlu0 3
        %2473 = vperm.xlu0 %2472, %v2127
        %v2474 = vpop.permute.xlu0 %2473
        %2477 = vset.pattern.permute.xlu0 3
        %2478 = vperm.xlu0 %2477, %v2128
        %v2479 = vpop.permute.xlu0 %2478
        %2482 = vset.pattern.permute.xlu0 3
        %2483 = vperm.xlu0 %2482, %v2129
        %v2484 = vpop.permute.xlu0 %2483
        %2487 = vset.pattern.permute.xlu0 3
        %2488 = vperm.xlu0 %2487, %v2130
        %v2489 = vpop.permute.xlu0 %2488
        %2492 = vset.pattern.permute.xlu0 3
        %2493 = vperm.xlu0 %2492, %v2131
        %v2494 = vpop.permute.xlu0 %2493
        %2497 = vset.pattern.permute.xlu0 3
        %2498 = vperm.xlu0 %2497, %v2132
        %v2499 = vpop.permute.xlu0 %2498
        %2502 = vset.pattern.permute.xlu0 3
        %2503 = vperm.xlu0 %2502, %v2133
        %v2504 = vpop.permute.xlu0 %2503
        %2507 = vset.pattern.permute.xlu0 3
        %2508 = vperm.xlu0 %2507, %v2134
        %v2509 = vpop.permute.xlu0 %2508
        %2512 = vset.pattern.permute.xlu0 3
        %2513 = vperm.xlu0 %2512, %v2135
        %v2514 = vpop.permute.xlu0 %2513
        %2517 = vset.pattern.permute.xlu0 3
        %2518 = vperm.xlu0 %2517, %v2136
        %v2519 = vpop.permute.xlu0 %2518
        %2522 = vset.pattern.permute.xlu0 3
        %2523 = vperm.xlu0 %2522, %v2137
        %v2524 = vpop.permute.xlu0 %2523
        %2527 = vset.pattern.permute.xlu0 3
        %2528 = vperm.xlu0 %2527, %v2138
        %v2529 = vpop.permute.xlu0 %2528
        %2532 = vset.pattern.permute.xlu0 3
        %2533 = vperm.xlu0 %2532, %v2139
        %v2534 = vpop.permute.xlu0 %2533
        %2537 = vset.pattern.permute.xlu0 3
        %2538 = vperm.xlu0 %2537, %v2140
        %v2539 = vpop.permute.xlu0 %2538
        %2542 = vset.pattern.permute.xlu0 3
        %2543 = vperm.xlu0 %2542, %v2141
        %v2544 = vpop.permute.xlu0 %2543
        %2547 = vset.pattern.permute.xlu0 3
        %2548 = vperm.xlu0 %2547, %v2142
        %v2549 = vpop.permute.xlu0 %2548
        %2552 = vset.pattern.permute.xlu0 3
        %2553 = vperm.xlu0 %2552, %v2143
        %v2554 = vpop.permute.xlu0 %2553
        %2557 = vset.pattern.permute.xlu0 3
        %2558 = vperm.xlu0 %2557, %v2144
        %v2559 = vpop.permute.xlu0 %2558
        %2562 = vset.pattern.permute.xlu0 3
        %2563 = vperm.xlu0 %2562, %v2145
        %v2564 = vpop.permute.xlu0 %2563
        %2567 = vset.pattern.permute.xlu0 3
        %2568 = vperm.xlu0 %2567, %v2146
        %v2569 = vpop.permute.xlu0 %2568
        %2572 = vset.pattern.permute.xlu0 3
        %2573 = vperm.xlu0 %2572, %v2147
        %v2574 = vpop.permute.xlu0 %2573
        %2577 = vset.pattern.permute.xlu0 3
        %2578 = vperm.xlu0 %2577, %v2148
        %v2579 = vpop.permute.xlu0 %2578
        %2582 = vset.pattern.permute.xlu0 3
        %2583 = vperm.xlu0 %2582, %v2149
        %v2584 = vpop.permute.xlu0 %2583
        %2587 = vset.pattern.permute.xlu0 3
        %2588 = vperm.xlu0 %2587, %v2150
        %v2589 = vpop.permute.xlu0 %2588
        %2592 = vset.pattern.permute.xlu0 3
        %2593 = vperm.xlu0 %2592, %v2151
        %v2594 = vpop.permute.xlu0 %2593
        %2597 = vset.pattern.permute.xlu0 3
        %2598 = vperm.xlu0 %2597, %v2152
        %v2599 = vpop.permute.xlu0 %2598
        %2602 = vset.pattern.permute.xlu0 3
        %2603 = vperm.xlu0 %2602, %v2153
        %v2604 = vpop.permute.xlu0 %2603
        %2607 = vset.pattern.permute.xlu0 3
        %2608 = vperm.xlu0 %2607, %v2154
        %v2609 = vpop.permute.xlu0 %2608
        %2612 = vset.pattern.permute.xlu0 3
        %2613 = vperm.xlu0 %2612, %v2155
        %v2614 = vpop.permute.xlu0 %2613
        %2617 = vset.pattern.permute.xlu0 3
        %2618 = vperm.xlu0 %2617, %v2156
        %v2619 = vpop.permute.xlu0 %2618
        %2622 = vset.pattern.permute.xlu0 3
        %2623 = vperm.xlu0 %2622, %v2157
        %v2624 = vpop.permute.xlu0 %2623
        %2627 = vset.pattern.permute.xlu0 3
        %2628 = vperm.xlu0 %2627, %v2158
        %v2629 = vpop.permute.xlu0 %2628
        %2632 = vset.pattern.permute.xlu0 3
        %2633 = vperm.xlu0 %2632, %v2159
        %v2634 = vpop.permute.xlu0 %2633
        %2637 = vset.pattern.permute.xlu0 3
        %2638 = vperm.xlu0 %2637, %v2160
        %v2639 = vpop.permute.xlu0 %2638
        %2642 = vset.pattern.permute.xlu0 3
        %2643 = vperm.xlu0 %2642, %v2161
        %v2644 = vpop.permute.xlu0 %2643
        %2647 = vset.pattern.permute.xlu0 3
        %2648 = vperm.xlu0 %2647, %v2162
        %v2649 = vpop.permute.xlu0 %2648
        %2652 = vset.pattern.permute.xlu0 3
        %2653 = vperm.xlu0 %2652, %v2163
        %v2654 = vpop.permute.xlu0 %2653
        %2657 = vset.pattern.permute.xlu0 3
        %2658 = vperm.xlu0 %2657, %v2164
        %v2659 = vpop.permute.xlu0 %2658
        %2662 = vset.pattern.permute.xlu0 3
        %2663 = vperm.xlu0 %2662, %v2165
        %v2664 = vpop.permute.xlu0 %2663
        %2667 = vset.pattern.permute.xlu0 3
        %2668 = vperm.xlu0 %2667, %v2166
        %v2669 = vpop.permute.xlu0 %2668
        %2672 = vset.pattern.permute.xlu0 3
        %2673 = vperm.xlu0 %2672, %v2167
        %v2674 = vpop.permute.xlu0 %2673
        %2677 = vset.pattern.permute.xlu0 3
        %2678 = vperm.xlu0 %2677, %v2168
        %v2679 = vpop.permute.xlu0 %2678
        %2682 = vset.pattern.permute.xlu0 3
        %2683 = vperm.xlu0 %2682, %v2169
        %v2684 = vpop.permute.xlu0 %2683
        %2687 = vset.pattern.permute.xlu0 3
        %2688 = vperm.xlu0 %2687, %v2170
        %v2689 = vpop.permute.xlu0 %2688
        %2692 = vset.pattern.permute.xlu0 3
        %2693 = vperm.xlu0 %2692, %v2171
        %v2694 = vpop.permute.xlu0 %2693
        %2697 = vset.pattern.permute.xlu0 3
        %2698 = vperm.xlu0 %2697, %v2172
        %v2699 = vpop.permute.xlu0 %2698
        %2702 = vset.pattern.permute.xlu0 3
        %2703 = vperm.xlu0 %2702, %v2173
        %v2704 = vpop.permute.xlu0 %2703
        %2707 = vset.pattern.permute.xlu0 3
        %2708 = vperm.xlu0 %2707, %v2174
        %v2709 = vpop.permute.xlu0 %2708
        %2712 = vset.pattern.permute.xlu0 3
        %2713 = vperm.xlu0 %2712, %v2175
        %v2714 = vpop.permute.xlu0 %2713
        %2717 = vset.pattern.permute.xlu0 3
        %2718 = vperm.xlu0 %2717, %v2176
        %v2719 = vpop.permute.xlu0 %2718
        %2722 = vset.pattern.permute.xlu0 3
        %2723 = vperm.xlu0 %2722, %v2177
        %v2724 = vpop.permute.xlu0 %2723
        %2727 = vset.pattern.permute.xlu0 3
        %2728 = vperm.xlu0 %2727, %v2178
        %v2729 = vpop.permute.xlu0 %2728
        %2732 = vset.pattern.permute.xlu0 3
        %2733 = vperm.xlu0 %2732, %v2179
        %v2734 = vpop.permute.xlu0 %2733
        %2737 = vset.pattern.permute.xlu0 3
        %2738 = vperm.xlu0 %2737, %v2180
        %v2739 = vpop.permute.xlu0 %2738
        %2742 = vset.pattern.permute.xlu0 3
        %2743 = vperm.xlu0 %2742, %v2181
        %v2744 = vpop.permute.xlu0 %2743
        %2747 = vset.pattern.permute.xlu0 3
        %2748 = vperm.xlu0 %2747, %v2182
        %v2749 = vpop.permute.xlu0 %2748
        %2752 = vset.pattern.permute.xlu0 3
        %2753 = vperm.xlu0 %2752, %v2183
        %v2754 = vpop.permute.xlu0 %2753
        %2757 = vset.pattern.permute.xlu0 3
        %2758 = vperm.xlu0 %2757, %v2184
        %v2759 = vpop.permute.xlu0 %2758
        %2762 = vset.pattern.permute.xlu0 3
        %2763 = vperm.xlu0 %2762, %v2185
        %v2764 = vpop.permute.xlu0 %2763
        %2767 = vset.pattern.permute.xlu0 3
        %2768 = vperm.xlu0 %2767, %v2186
        %v2769 = vpop.permute.xlu0 %2768
        %2772 = vset.pattern.permute.xlu0 3
        %2773 = vperm.xlu0 %2772, %v2187
        %v2774 = vpop.permute.xlu0 %2773
        %2777 = vset.pattern.permute.xlu0 3
        %2778 = vperm.xlu0 %2777, %v2188
        %v2779 = vpop.permute.xlu0 %2778
        %2782 = vset.pattern.permute.xlu0 3
        %2783 = vperm.xlu0 %2782, %v2189
        %v2784 = vpop.permute.xlu0 %2783
        %2787 = vset.pattern.permute.xlu0 3
        %2788 = vperm.xlu0 %2787, %v2190
        %v2789 = vpop.permute.xlu0 %2788
        %2792 = vset.pattern.permute.xlu0 3
        %2793 = vperm.xlu0 %2792, %v2191
        %v2794 = vpop.permute.xlu0 %2793
        %2797 = vset.pattern.permute.xlu0 3
        %2798 = vperm.xlu0 %2797, %v2192
        %v2799 = vpop.permute.xlu0 %2798
        %2802 = vset.pattern.permute.xlu0 3
        %2803 = vperm.xlu0 %2802, %v2193
        %v2804 = vpop.permute.xlu0 %2803
        %2807 = vset.pattern.permute.xlu0 3
        %2808 = vperm.xlu0 %2807, %v2194
        %v2809 = vpop.permute.xlu0 %2808
        %2812 = vset.pattern.permute.xlu0 3
        %2813 = vperm.xlu0 %2812, %v2195
        %v2814 = vpop.permute.xlu0 %2813
        %2817 = vset.pattern.permute.xlu0 3
        %2818 = vperm.xlu0 %2817, %v2196
        %v2819 = vpop.permute.xlu0 %2818
        %2822 = vset.pattern.permute.xlu0 3
        %2823 = vperm.xlu0 %2822, %v2197
        %v2824 = vpop.permute.xlu0 %2823
        %2827 = vset.pattern.permute.xlu0 3
        %2828 = vperm.xlu0 %2827, %v2198
        %v2829 = vpop.permute.xlu0 %2828
        %2832 = vset.pattern.permute.xlu0 3
        %2833 = vperm.xlu0 %2832, %v2199
        %v2834 = vpop.permute.xlu0 %2833
        %2837 = vset.pattern.permute.xlu0 3
        %2838 = vperm.xlu0 %2837, %v2200
        %v2839 = vpop.permute.xlu0 %2838
        %v2841 = vmul.f32 %v1305, %v2204
        %v2842 = vmul.f32 %v1306, %v2209
        %v2843 = vmul.f32 %v1307, %v2214
        %v2844 = vmul.f32 %v1308, %v2219
        %v2845 = vmul.f32 %v1309, %v2224
        %v2846 = vmul.f32 %v1310, %v2229
        %v2847 = vmul.f32 %v1311, %v2234
        %v2848 = vmul.f32 %v1312, %v2239
        %v2849 = vmul.f32 %v1313, %v2244
        %v2850 = vmul.f32 %v1314, %v2249
        %v2851 = vmul.f32 %v1315, %v2254
        %v2852 = vmul.f32 %v1316, %v2259
        %v2853 = vmul.f32 %v1317, %v2264
        %v2854 = vmul.f32 %v1318, %v2269
        %v2855 = vmul.f32 %v1319, %v2274
        %v2856 = vmul.f32 %v1320, %v2279
        %v2857 = vmul.f32 %v1321, %v2284
        %v2858 = vmul.f32 %v1322, %v2289
        %v2859 = vmul.f32 %v1323, %v2294
        %v2860 = vmul.f32 %v1324, %v2299
        %v2861 = vmul.f32 %v1325, %v2304
        %v2862 = vmul.f32 %v1326, %v2309
        %v2863 = vmul.f32 %v1327, %v2314
        %v2864 = vmul.f32 %v1328, %v2319
        %v2865 = vmul.f32 %v1329, %v2324
        %v2866 = vmul.f32 %v1330, %v2329
        %v2867 = vmul.f32 %v1331, %v2334
        %v2868 = vmul.f32 %v1332, %v2339
        %v2869 = vmul.f32 %v1333, %v2344
        %v2870 = vmul.f32 %v1334, %v2349
        %v2871 = vmul.f32 %v1335, %v2354
        %v2872 = vmul.f32 %v1336, %v2359
        %v2873 = vmul.f32 %v1337, %v2364
        %v2874 = vmul.f32 %v1338, %v2369
        %v2875 = vmul.f32 %v1339, %v2374
        %v2876 = vmul.f32 %v1340, %v2379
        %v2877 = vmul.f32 %v1341, %v2384
        %v2878 = vmul.f32 %v1342, %v2389
        %v2879 = vmul.f32 %v1343, %v2394
        %v2880 = vmul.f32 %v1344, %v2399
        %v2881 = vmul.f32 %v1345, %v2404
        %v2882 = vmul.f32 %v1346, %v2409
        %v2883 = vmul.f32 %v1347, %v2414
        %v2884 = vmul.f32 %v1348, %v2419
        %v2885 = vmul.f32 %v1349, %v2424
        %v2886 = vmul.f32 %v1350, %v2429
        %v2887 = vmul.f32 %v1351, %v2434
        %v2888 = vmul.f32 %v1352, %v2439
        %v2889 = vmul.f32 %v1353, %v2444
        %v2890 = vmul.f32 %v1354, %v2449
        %v2891 = vmul.f32 %v1355, %v2454
        %v2892 = vmul.f32 %v1356, %v2459
        %v2893 = vmul.f32 %v1357, %v2464
        %v2894 = vmul.f32 %v1358, %v2469
        %v2895 = vmul.f32 %v1359, %v2474
        %v2896 = vmul.f32 %v1360, %v2479
        %v2897 = vmul.f32 %v1361, %v2484
        %v2898 = vmul.f32 %v1362, %v2489
        %v2899 = vmul.f32 %v1363, %v2494
        %v2900 = vmul.f32 %v1364, %v2499
        %v2901 = vmul.f32 %v1365, %v2504
        %v2902 = vmul.f32 %v1366, %v2509
        %v2903 = vmul.f32 %v1367, %v2514
        %v2904 = vmul.f32 %v1368, %v2519
        %v2905 = vmul.f32 %v1369, %v2524
        %v2906 = vmul.f32 %v1370, %v2529
        %v2907 = vmul.f32 %v1371, %v2534
        %v2908 = vmul.f32 %v1372, %v2539
        %v2909 = vmul.f32 %v1373, %v2544
        %v2910 = vmul.f32 %v1374, %v2549
        %v2911 = vmul.f32 %v1375, %v2554
        %v2912 = vmul.f32 %v1376, %v2559
        %v2913 = vmul.f32 %v1377, %v2564
        %v2914 = vmul.f32 %v1378, %v2569
        %v2915 = vmul.f32 %v1379, %v2574
        %v2916 = vmul.f32 %v1380, %v2579
        %v2917 = vmul.f32 %v1381, %v2584
        %v2918 = vmul.f32 %v1382, %v2589
        %v2919 = vmul.f32 %v1383, %v2594
        %v2920 = vmul.f32 %v1384, %v2599
        %v2921 = vmul.f32 %v1385, %v2604
        %v2922 = vmul.f32 %v1386, %v2609
        %v2923 = vmul.f32 %v1387, %v2614
        %v2924 = vmul.f32 %v1388, %v2619
        %v2925 = vmul.f32 %v1389, %v2624
        %v2926 = vmul.f32 %v1390, %v2629
        %v2927 = vmul.f32 %v1391, %v2634
        %v2928 = vmul.f32 %v1392, %v2639
        %v2929 = vmul.f32 %v1393, %v2644
        %v2930 = vmul.f32 %v1394, %v2649
        %v2931 = vmul.f32 %v1395, %v2654
        %v2932 = vmul.f32 %v1396, %v2659
        %v2933 = vmul.f32 %v1397, %v2664
        %v2934 = vmul.f32 %v1398, %v2669
        %v2935 = vmul.f32 %v1399, %v2674
        %v2936 = vmul.f32 %v1400, %v2679
        %v2937 = vmul.f32 %v1401, %v2684
        %v2938 = vmul.f32 %v1402, %v2689
        %v2939 = vmul.f32 %v1403, %v2694
        %v2940 = vmul.f32 %v1404, %v2699
        %v2941 = vmul.f32 %v1405, %v2704
        %v2942 = vmul.f32 %v1406, %v2709
        %v2943 = vmul.f32 %v1407, %v2714
        %v2944 = vmul.f32 %v1408, %v2719
        %v2945 = vmul.f32 %v1409, %v2724
        %v2946 = vmul.f32 %v1410, %v2729
        %v2947 = vmul.f32 %v1411, %v2734
        %v2948 = vmul.f32 %v1412, %v2739
        %v2949 = vmul.f32 %v1413, %v2744
        %v2950 = vmul.f32 %v1414, %v2749
        %v2951 = vmul.f32 %v1415, %v2754
        %v2952 = vmul.f32 %v1416, %v2759
        %v2953 = vmul.f32 %v1417, %v2764
        %v2954 = vmul.f32 %v1418, %v2769
        %v2955 = vmul.f32 %v1419, %v2774
        %v2956 = vmul.f32 %v1420, %v2779
        %v2957 = vmul.f32 %v1421, %v2784
        %v2958 = vmul.f32 %v1422, %v2789
        %v2959 = vmul.f32 %v1423, %v2794
        %v2960 = vmul.f32 %v1424, %v2799
        %v2961 = vmul.f32 %v1425, %v2804
        %v2962 = vmul.f32 %v1426, %v2809
        %v2963 = vmul.f32 %v1427, %v2814
        %v2964 = vmul.f32 %v1428, %v2819
        %v2965 = vmul.f32 %v1429, %v2824
        %v2966 = vmul.f32 %v1430, %v2829
        %v2967 = vmul.f32 %v1431, %v2834
        %v2968 = vmul.f32 %v1432, %v2839
        %v2969 = vadd.f32 %v1945, %v2841
        %v2970 = vadd.f32 %v1946, %v2842
        %v2971 = vadd.f32 %v1947, %v2843
        %v2972 = vadd.f32 %v1948, %v2844
        %v2973 = vadd.f32 %v1949, %v2845
        %v2974 = vadd.f32 %v1950, %v2846
        %v2975 = vadd.f32 %v1951, %v2847
        %v2976 = vadd.f32 %v1952, %v2848
        %v2977 = vadd.f32 %v1953, %v2849
        %v2978 = vadd.f32 %v1954, %v2850
        %v2979 = vadd.f32 %v1955, %v2851
        %v2980 = vadd.f32 %v1956, %v2852
        %v2981 = vadd.f32 %v1957, %v2853
        %v2982 = vadd.f32 %v1958, %v2854
        %v2983 = vadd.f32 %v1959, %v2855
        %v2984 = vadd.f32 %v1960, %v2856
        %v2985 = vadd.f32 %v1961, %v2857
        %v2986 = vadd.f32 %v1962, %v2858
        %v2987 = vadd.f32 %v1963, %v2859
        %v2988 = vadd.f32 %v1964, %v2860
        %v2989 = vadd.f32 %v1965, %v2861
        %v2990 = vadd.f32 %v1966, %v2862
        %v2991 = vadd.f32 %v1967, %v2863
        %v2992 = vadd.f32 %v1968, %v2864
        %v2993 = vadd.f32 %v1969, %v2865
        %v2994 = vadd.f32 %v1970, %v2866
        %v2995 = vadd.f32 %v1971, %v2867
        %v2996 = vadd.f32 %v1972, %v2868
        %v2997 = vadd.f32 %v1973, %v2869
        %v2998 = vadd.f32 %v1974, %v2870
        %v2999 = vadd.f32 %v1975, %v2871
        %v3000 = vadd.f32 %v1976, %v2872
        %v3001 = vadd.f32 %v1977, %v2873
        %v3002 = vadd.f32 %v1978, %v2874
        %v3003 = vadd.f32 %v1979, %v2875
        %v3004 = vadd.f32 %v1980, %v2876
        %v3005 = vadd.f32 %v1981, %v2877
        %v3006 = vadd.f32 %v1982, %v2878
        %v3007 = vadd.f32 %v1983, %v2879
        %v3008 = vadd.f32 %v1984, %v2880
        %v3009 = vadd.f32 %v1985, %v2881
        %v3010 = vadd.f32 %v1986, %v2882
        %v3011 = vadd.f32 %v1987, %v2883
        %v3012 = vadd.f32 %v1988, %v2884
        %v3013 = vadd.f32 %v1989, %v2885
        %v3014 = vadd.f32 %v1990, %v2886
        %v3015 = vadd.f32 %v1991, %v2887
        %v3016 = vadd.f32 %v1992, %v2888
        %v3017 = vadd.f32 %v1993, %v2889
        %v3018 = vadd.f32 %v1994, %v2890
        %v3019 = vadd.f32 %v1995, %v2891
        %v3020 = vadd.f32 %v1996, %v2892
        %v3021 = vadd.f32 %v1997, %v2893
        %v3022 = vadd.f32 %v1998, %v2894
        %v3023 = vadd.f32 %v1999, %v2895
        %v3024 = vadd.f32 %v2000, %v2896
        %v3025 = vadd.f32 %v2001, %v2897
        %v3026 = vadd.f32 %v2002, %v2898
        %v3027 = vadd.f32 %v2003, %v2899
        %v3028 = vadd.f32 %v2004, %v2900
        %v3029 = vadd.f32 %v2005, %v2901
        %v3030 = vadd.f32 %v2006, %v2902
        %v3031 = vadd.f32 %v2007, %v2903
        %v3032 = vadd.f32 %v2008, %v2904
        %v3033 = vadd.f32 %v2009, %v2905
        %v3034 = vadd.f32 %v2010, %v2906
        %v3035 = vadd.f32 %v2011, %v2907
        %v3036 = vadd.f32 %v2012, %v2908
        %v3037 = vadd.f32 %v2013, %v2909
        %v3038 = vadd.f32 %v2014, %v2910
        %v3039 = vadd.f32 %v2015, %v2911
        %v3040 = vadd.f32 %v2016, %v2912
        %v3041 = vadd.f32 %v2017, %v2913
        %v3042 = vadd.f32 %v2018, %v2914
        %v3043 = vadd.f32 %v2019, %v2915
        %v3044 = vadd.f32 %v2020, %v2916
        %v3045 = vadd.f32 %v2021, %v2917
        %v3046 = vadd.f32 %v2022, %v2918
        %v3047 = vadd.f32 %v2023, %v2919
        %v3048 = vadd.f32 %v2024, %v2920
        %v3049 = vadd.f32 %v2025, %v2921
        %v3050 = vadd.f32 %v2026, %v2922
        %v3051 = vadd.f32 %v2027, %v2923
        %v3052 = vadd.f32 %v2028, %v2924
        %v3053 = vadd.f32 %v2029, %v2925
        %v3054 = vadd.f32 %v2030, %v2926
        %v3055 = vadd.f32 %v2031, %v2927
        %v3056 = vadd.f32 %v2032, %v2928
        %v3057 = vadd.f32 %v2033, %v2929
        %v3058 = vadd.f32 %v2034, %v2930
        %v3059 = vadd.f32 %v2035, %v2931
        %v3060 = vadd.f32 %v2036, %v2932
        %v3061 = vadd.f32 %v2037, %v2933
        %v3062 = vadd.f32 %v2038, %v2934
        %v3063 = vadd.f32 %v2039, %v2935
        %v3064 = vadd.f32 %v2040, %v2936
        %v3065 = vadd.f32 %v2041, %v2937
        %v3066 = vadd.f32 %v2042, %v2938
        %v3067 = vadd.f32 %v2043, %v2939
        %v3068 = vadd.f32 %v2044, %v2940
        %v3069 = vadd.f32 %v2045, %v2941
        %v3070 = vadd.f32 %v2046, %v2942
        %v3071 = vadd.f32 %v2047, %v2943
        %v3072 = vadd.f32 %v2048, %v2944
        %v3073 = vadd.f32 %v2049, %v2945
        %v3074 = vadd.f32 %v2050, %v2946
        %v3075 = vadd.f32 %v2051, %v2947
        %v3076 = vadd.f32 %v2052, %v2948
        %v3077 = vadd.f32 %v2053, %v2949
        %v3078 = vadd.f32 %v2054, %v2950
        %v3079 = vadd.f32 %v2055, %v2951
        %v3080 = vadd.f32 %v2056, %v2952
        %v3081 = vadd.f32 %v2057, %v2953
        %v3082 = vadd.f32 %v2058, %v2954
        %v3083 = vadd.f32 %v2059, %v2955
        %v3084 = vadd.f32 %v2060, %v2956
        %v3085 = vadd.f32 %v2061, %v2957
        %v3086 = vadd.f32 %v2062, %v2958
        %v3087 = vadd.f32 %v2063, %v2959
        %v3088 = vadd.f32 %v2064, %v2960
        %v3089 = vadd.f32 %v2065, %v2961
        %v3090 = vadd.f32 %v2066, %v2962
        %v3091 = vadd.f32 %v2067, %v2963
        %v3092 = vadd.f32 %v2068, %v2964
        %v3093 = vadd.f32 %v2069, %v2965
        %v3094 = vadd.f32 %v2070, %v2966
        %v3095 = vadd.f32 %v2071, %v2967
        %v3096 = vadd.f32 %v2072, %v2968
        %3097 = vst [vmem:[%s137] sm:$0xff] %v2969
        %3098 = vst [vmem:[%s137 + $0x8] sm:$0xff] %v2970
        %3099 = vst [vmem:[%s137 + $0x10] sm:$0xff] %v2971
        %3100 = vst [vmem:[%s137 + $0x18] sm:$0xff] %v2972
        %3101 = vst [vmem:[%s137 + $0x20] sm:$0xff] %v2973
        %3102 = vst [vmem:[%s137 + $0x28] sm:$0xff] %v2974
        %3103 = vst [vmem:[%s137 + $0x30] sm:$0xff] %v2975
        %3104 = vst [vmem:[%s137 + $0x38] sm:$0xff] %v2976
        %3105 = vst [vmem:[%s137 + $0x40] sm:$0xff] %v2977
        %3106 = vst [vmem:[%s137 + $0x48] sm:$0xff] %v2978
        %3107 = vst [vmem:[%s137 + $0x50] sm:$0xff] %v2979
        %3108 = vst [vmem:[%s137 + $0x58] sm:$0xff] %v2980
        %3109 = vst [vmem:[%s137 + $0x60] sm:$0xff] %v2981
        %3110 = vst [vmem:[%s137 + $0x68] sm:$0xff] %v2982
        %3111 = vst [vmem:[%s137 + $0x70] sm:$0xff] %v2983
        %3112 = vst [vmem:[%s137 + $0x78] sm:$0xff] %v2984
        %3113 = vst [vmem:[%s137 + $0x80] sm:$0xff] %v2985
        %3114 = vst [vmem:[%s137 + $0x88] sm:$0xff] %v2986
        %3115 = vst [vmem:[%s137 + $0x90] sm:$0xff] %v2987
        %3116 = vst [vmem:[%s137 + $0x98] sm:$0xff] %v2988
        %3117 = vst [vmem:[%s137 + $0xa0] sm:$0xff] %v2989
        %3118 = vst [vmem:[%s137 + $0xa8] sm:$0xff] %v2990
        %3119 = vst [vmem:[%s137 + $0xb0] sm:$0xff] %v2991
        %3120 = vst [vmem:[%s137 + $0xb8] sm:$0xff] %v2992
        %3121 = vst [vmem:[%s137 + $0xc0] sm:$0xff] %v2993
        %3122 = vst [vmem:[%s137 + $0xc8] sm:$0xff] %v2994
        %3123 = vst [vmem:[%s137 + $0xd0] sm:$0xff] %v2995
        %3124 = vst [vmem:[%s137 + $0xd8] sm:$0xff] %v2996
        %3125 = vst [vmem:[%s137 + $0xe0] sm:$0xff] %v2997
        %3126 = vst [vmem:[%s137 + $0xe8] sm:$0xff] %v2998
        %3127 = vst [vmem:[%s137 + $0xf0] sm:$0xff] %v2999
        %3128 = vst [vmem:[%s137 + $0xf8] sm:$0xff] %v3000
        %3129 = vst [vmem:[%s137 + $0x100] sm:$0xff] %v3001
        %3130 = vst [vmem:[%s137 + $0x108] sm:$0xff] %v3002
        %3131 = vst [vmem:[%s137 + $0x110] sm:$0xff] %v3003
        %3132 = vst [vmem:[%s137 + $0x118] sm:$0xff] %v3004
        %3133 = vst [vmem:[%s137 + $0x120] sm:$0xff] %v3005
        %3134 = vst [vmem:[%s137 + $0x128] sm:$0xff] %v3006
        %3135 = vst [vmem:[%s137 + $0x130] sm:$0xff] %v3007
        %3136 = vst [vmem:[%s137 + $0x138] sm:$0xff] %v3008
        %3137 = vst [vmem:[%s137 + $0x140] sm:$0xff] %v3009
        %3138 = vst [vmem:[%s137 + $0x148] sm:$0xff] %v3010
        %3139 = vst [vmem:[%s137 + $0x150] sm:$0xff] %v3011
        %3140 = vst [vmem:[%s137 + $0x158] sm:$0xff] %v3012
        %3141 = vst [vmem:[%s137 + $0x160] sm:$0xff] %v3013
        %3142 = vst [vmem:[%s137 + $0x168] sm:$0xff] %v3014
        %3143 = vst [vmem:[%s137 + $0x170] sm:$0xff] %v3015
        %3144 = vst [vmem:[%s137 + $0x178] sm:$0xff] %v3016
        %3145 = vst [vmem:[%s137 + $0x180] sm:$0xff] %v3017
        %3146 = vst [vmem:[%s137 + $0x188] sm:$0xff] %v3018
        %3147 = vst [vmem:[%s137 + $0x190] sm:$0xff] %v3019
        %3148 = vst [vmem:[%s137 + $0x198] sm:$0xff] %v3020
        %3149 = vst [vmem:[%s137 + $0x1a0] sm:$0xff] %v3021
        %3150 = vst [vmem:[%s137 + $0x1a8] sm:$0xff] %v3022
        %3151 = vst [vmem:[%s137 + $0x1b0] sm:$0xff] %v3023
        %3152 = vst [vmem:[%s137 + $0x1b8] sm:$0xff] %v3024
        %3153 = vst [vmem:[%s137 + $0x1c0] sm:$0xff] %v3025
        %3154 = vst [vmem:[%s137 + $0x1c8] sm:$0xff] %v3026
        %3155 = vst [vmem:[%s137 + $0x1d0] sm:$0xff] %v3027
        %3156 = vst [vmem:[%s137 + $0x1d8] sm:$0xff] %v3028
        %3157 = vst [vmem:[%s137 + $0x1e0] sm:$0xff] %v3029
        %3158 = vst [vmem:[%s137 + $0x1e8] sm:$0xff] %v3030
        %3159 = vst [vmem:[%s137 + $0x1f0] sm:$0xff] %v3031
        %3160 = vst [vmem:[%s137 + $0x1f8] sm:$0xff] %v3032
        %3161 = vst [vmem:[%s137 + $0x200] sm:$0xff] %v3033
        %3162 = vst [vmem:[%s137 + $0x208] sm:$0xff] %v3034
        %3163 = vst [vmem:[%s137 + $0x210] sm:$0xff] %v3035
        %3164 = vst [vmem:[%s137 + $0x218] sm:$0xff] %v3036
        %3165 = vst [vmem:[%s137 + $0x220] sm:$0xff] %v3037
        %3166 = vst [vmem:[%s137 + $0x228] sm:$0xff] %v3038
        %3167 = vst [vmem:[%s137 + $0x230] sm:$0xff] %v3039
        %3168 = vst [vmem:[%s137 + $0x238] sm:$0xff] %v3040
        %3169 = vst [vmem:[%s137 + $0x240] sm:$0xff] %v3041
        %3170 = vst [vmem:[%s137 + $0x248] sm:$0xff] %v3042
        %3171 = vst [vmem:[%s137 + $0x250] sm:$0xff] %v3043
        %3172 = vst [vmem:[%s137 + $0x258] sm:$0xff] %v3044
        %3173 = vst [vmem:[%s137 + $0x260] sm:$0xff] %v3045
        %3174 = vst [vmem:[%s137 + $0x268] sm:$0xff] %v3046
        %3175 = vst [vmem:[%s137 + $0x270] sm:$0xff] %v3047
        %3176 = vst [vmem:[%s137 + $0x278] sm:$0xff] %v3048
        %3177 = vst [vmem:[%s137 + $0x280] sm:$0xff] %v3049
        %3178 = vst [vmem:[%s137 + $0x288] sm:$0xff] %v3050
        %3179 = vst [vmem:[%s137 + $0x290] sm:$0xff] %v3051
        %3180 = vst [vmem:[%s137 + $0x298] sm:$0xff] %v3052
        %3181 = vst [vmem:[%s137 + $0x2a0] sm:$0xff] %v3053
        %3182 = vst [vmem:[%s137 + $0x2a8] sm:$0xff] %v3054
        %3183 = vst [vmem:[%s137 + $0x2b0] sm:$0xff] %v3055
        %3184 = vst [vmem:[%s137 + $0x2b8] sm:$0xff] %v3056
        %3185 = vst [vmem:[%s137 + $0x2c0] sm:$0xff] %v3057
        %3186 = vst [vmem:[%s137 + $0x2c8] sm:$0xff] %v3058
        %3187 = vst [vmem:[%s137 + $0x2d0] sm:$0xff] %v3059
        %3188 = vst [vmem:[%s137 + $0x2d8] sm:$0xff] %v3060
        %3189 = vst [vmem:[%s137 + $0x2e0] sm:$0xff] %v3061
        %3190 = vst [vmem:[%s137 + $0x2e8] sm:$0xff] %v3062
        %3191 = vst [vmem:[%s137 + $0x2f0] sm:$0xff] %v3063
        %3192 = vst [vmem:[%s137 + $0x2f8] sm:$0xff] %v3064
        %3193 = vst [vmem:[%s137 + $0x300] sm:$0xff] %v3065
        %3194 = vst [vmem:[%s137 + $0x308] sm:$0xff] %v3066
        %3195 = vst [vmem:[%s137 + $0x310] sm:$0xff] %v3067
        %3196 = vst [vmem:[%s137 + $0x318] sm:$0xff] %v3068
        %3197 = vst [vmem:[%s137 + $0x320] sm:$0xff] %v3069
        %3198 = vst [vmem:[%s137 + $0x328] sm:$0xff] %v3070
        %3199 = vst [vmem:[%s137 + $0x330] sm:$0xff] %v3071
        %3200 = vst [vmem:[%s137 + $0x338] sm:$0xff] %v3072
        %3201 = vst [vmem:[%s137 + $0x340] sm:$0xff] %v3073
        %3202 = vst [vmem:[%s137 + $0x348] sm:$0xff] %v3074
        %3203 = vst [vmem:[%s137 + $0x350] sm:$0xff] %v3075
        %3204 = vst [vmem:[%s137 + $0x358] sm:$0xff] %v3076
        %3205 = vst [vmem:[%s137 + $0x360] sm:$0xff] %v3077
        %3206 = vst [vmem:[%s137 + $0x368] sm:$0xff] %v3078
        %3207 = vst [vmem:[%s137 + $0x370] sm:$0xff] %v3079
        %3208 = vst [vmem:[%s137 + $0x378] sm:$0xff] %v3080
        %3209 = vst [vmem:[%s137 + $0x380] sm:$0xff] %v3081
        %3210 = vst [vmem:[%s137 + $0x388] sm:$0xff] %v3082
        %3211 = vst [vmem:[%s137 + $0x390] sm:$0xff] %v3083
        %3212 = vst [vmem:[%s137 + $0x398] sm:$0xff] %v3084
        %3213 = vst [vmem:[%s137 + $0x3a0] sm:$0xff] %v3085
        %3214 = vst [vmem:[%s137 + $0x3a8] sm:$0xff] %v3086
        %3215 = vst [vmem:[%s137 + $0x3b0] sm:$0xff] %v3087
        %3216 = vst [vmem:[%s137 + $0x3b8] sm:$0xff] %v3088
        %3217 = vst [vmem:[%s137 + $0x3c0] sm:$0xff] %v3089
        %3218 = vst [vmem:[%s137 + $0x3c8] sm:$0xff] %v3090
        %3219 = vst [vmem:[%s137 + $0x3d0] sm:$0xff] %v3091
        %3220 = vst [vmem:[%s137 + $0x3d8] sm:$0xff] %v3092
        %3221 = vst [vmem:[%s137 + $0x3e0] sm:$0xff] %v3093
        %3222 = vst [vmem:[%s137 + $0x3e8] sm:$0xff] %v3094
        %3223 = vst [vmem:[%s137 + $0x3f0] sm:$0xff] %v3095
        %3224 = vst [vmem:[%s137 + $0x3f8] sm:$0xff] %v3096
        %s3225 = sand.u32 %s71, 1
        %s3226 = scalar_lea.sflag [#allocation3], %s3225
        %s3227 = sand.u32 %s71, 1
        %s3228 = smul.addr %s3227, 1024
        %s3229 = scalar_lea.vmem [#allocation2], %s3228
        // Predicated region
        $region29: #{temporal_embedding.1} parent=27 // pred_check
          %p3230 = pneg %p81
        $region30: #{temporal_embedding.1} parent=27 // pred_check_branch
          %3232 = sbr.rel (%p3230) target = $region32
        $region31: #{temporal_embedding.1} parent=27 // pred_region
          %s3233 = smul.u32 128, %s16
          %3235 = vsyncadd %s3226, 0
          %s3236 = smul.addr %s3233, 8
          %s3237 = scalar_lea.hbm %s2, %s3236
          %s3238 = sshll.u32 %s3229, 4
          %s3239 = int_to_ptr.vmem [resolvable:$true] %s3238
          %s3240 = sshll.u32 %s3237, 4
          %s3241 = int_to_ptr.hbm [resolvable:$true] %s3240
          %3246 = dma.vmem_to_hbm [thread:$0]  %s3239, 16384, %s3241, %s3226, 128, 128, 8
        $region32: #{temporal_embedding.1} parent=27 // pred_fallthru
          _
      $region28: #{temporal_embedding.1} parent=5 // pred_fallthru
        _
      %p3247 = scmp.le.s32.totalorder 2, %s11
      // Predicated region
      $region33: #{temporal_embedding.1} parent=5 // pred_check
        %p3248 = pneg %p3247
      $region34: #{temporal_embedding.1} parent=5 // pred_check_branch
        %3250 = sbr.rel (%p3248) target = $region36
      $region35: #{temporal_embedding.1} parent=5 // pred_region
        %s3251 = ssub.s32 %s11, 2
        // Predicated region
        $region37: #{temporal_embedding.1} parent=35 // pred_check
          %p3252 = pneg %p87
        $region38: #{temporal_embedding.1} parent=35 // pred_check_branch
          %3254 = sbr.rel (%p3252) target = $region40
        $region39: #{temporal_embedding.1} parent=35 // pred_region
          %s3255 = sand.u32 %s72, 1
          %s3256 = scalar_lea.sflag [#allocation3], %s3255
          %s3257 = sand.u32 %s72, 1
          %s3258 = smul.addr %s3257, 1024
          %s3259 = scalar_lea.vmem [#allocation2], %s3258
          %3261 = dma.done %s3256, 16384
        $region40: #{temporal_embedding.1} parent=35 // pred_fallthru
          _
      $region36: #{temporal_embedding.1} parent=5 // pred_fallthru
        _
    $region6: #{temporal_embedding.1} parent=1 // loop_footer
      %s15 = sadd.s32 1, %s11
    $region7: #{temporal_embedding.1} parent=1 // loop_footer_branch
      %10 = sbr.rel target = $region3
    $region8: #{temporal_embedding.1} parent=1 // loop_exit
      _
    %3262 = vsyncpa [#allocation3], 1
    %s3263 = scalar_lea.sflag [#allocation3], 1
    %3264 = vsyncpa %s3263, 1

</llo_original>
